<compile_context>
chip_gen: v7x
topology: tpu7x:2x2x1
jax: 0.10.0
libtpu: 0.0.40
codegen_flags: <defaults>
</compile_context>

<pallas_src>
import numpy as np
import jax
import jax.numpy as jnp
from jax import lax
from jax.experimental import pallas as pl
from jax.experimental.pallas import tpu as pltpu


# ---------------------------------------------------------------------------
# Fused kernel: all LSTM layers + ReLU -> fc_1 -> ReLU -> fc head
# ---------------------------------------------------------------------------
def make_fused_kernel(num_layers, T, Bp, H):
    H4 = 4 * H

    def kernel(*args):
        # inputs: x, (wih, whh, b) * L, w1, b1, w2, b2 ; output: out ; scratch: xw, seq
        x_ref = args[0]
        lstm_refs = args[1:1 + 3 * num_layers]
        w1_ref, b1_ref, w2_ref, b2_ref = args[1 + 3 * num_layers:5 + 3 * num_layers]
        out_ref = args[5 + 3 * num_layers]
        xw_ref, seq_ref = args[6 + 3 * num_layers:]

        hns = []
        for l in range(num_layers):
            wih_ref = lstm_refs[3 * l + 0]   # (D_l, 4H)  bf16
            whh_ref = lstm_refs[3 * l + 1]   # (H,  4H)  bf16
            b_ref = lstm_refs[3 * l + 2]     # (1,  4H)  f32
            last_layer = (l == num_layers - 1)

            # ---- hoisted input projection: one big lane-dense matmul per layer ----
            inp = x_ref[...] if l == 0 else seq_ref[...]          # (T, Bp, D_l) bf16
            D_l = inp.shape[-1]
            xw = jnp.dot(inp.reshape(T * Bp, D_l),
                         wih_ref[...],
                         preferred_element_type=jnp.float32) + b_ref[...]
            xw_ref[...] = xw.reshape(T, Bp, H4)

            whh = whh_ref[...]                                    # hoisted out of loop

            # ---- serial recurrence: single (Bp, H) @ (H, 4H) matmul per step ----
            def step(t, carry):
                h, c = carry
                pre = xw_ref[t] + jnp.dot(h.astype(jnp.bfloat16), whh,
                                          preferred_element_type=jnp.float32)  # (Bp, 4H)
                i = jax.nn.sigmoid(pre[:, 0 * H:1 * H])
                f = jax.nn.sigmoid(pre[:, 1 * H:2 * H])
                g = jnp.tanh(pre[:, 2 * H:3 * H])
                o = jax.nn.sigmoid(pre[:, 3 * H:4 * H])
                c_new = f * c + i * g
                h_new = o * jnp.tanh(c_new)
                if not last_layer:
                    seq_ref[t] = h_new.astype(jnp.bfloat16)       # next layer's input
                return (h_new, c_new)

            h0 = jnp.zeros((Bp, H), jnp.float32)
            c0 = jnp.zeros((Bp, H), jnp.float32)
            h_last, _ = lax.fori_loop(0, T, step, (h0, c0), unroll=True)
            hns.append(h_last)

        # ---- head: relu(hn) -> fc_1 -> relu -> fc (output padded to 128 lanes) ----
        hn = jnp.concatenate(hns, axis=0)                          # (L*Bp, H) f32
        z = jnp.maximum(hn, 0.0)
        z = jnp.dot(z.astype(jnp.bfloat16), w1_ref[...],
                    preferred_element_type=jnp.float32) + b1_ref[...]
        z = jnp.maximum(z, 0.0)
        out_ref[...] = jnp.dot(z.astype(jnp.bfloat16), w2_ref[...],
                               preferred_element_type=jnp.float32) + b2_ref[...]

    return kernel


# ---------------------------------------------------------------------------
# Wrapper
# ---------------------------------------------------------------------------
_VMEM = pl.BlockSpec(memory_space=pltpu.MemorySpace.VMEM)
_C_PAD = 128  # lane-dense head output width


def lstm_model_forward(x, params):
    """x: (B, T, input_size), batch_first like the PyTorch module.
    Returns (num_layers * B, num_classes), matching hn.view(-1, H) -> head."""
    B, T, _ = x.shape
    L = len(params["lstm"])
    H = params["lstm"][0]["whh"].shape[0]
    C = params["w2"].shape[-1]
    Bp = max(8, ((B + 7) // 8) * 8)                  # sublane-dense batch

    # time-major, pad batch with zero rows, cast to bf16 (MXU input dtype)
    x_tm = jnp.transpose(x, (1, 0, 2)).astype(jnp.float32)       # (T, B, D)
    x_tm = jnp.pad(x_tm, ((0, 0), (0, Bp - B), (0, 0)))          # (T, Bp, D)
    x_tm = x_tm.astype(jnp.bfloat16)

    # pad final-layer weights/bias so the output store is 128-lane dense
    w2p = jnp.pad(params["w2"], ((0, 0), (0, _C_PAD - C)))
    b2p = jnp.pad(params["b2"], ((0, 0), (0, _C_PAD - C)))

    inputs = [x_tm]
    for layer in params["lstm"]:
        inputs += [layer["wih"], layer["whh"], layer["b"]]
    inputs += [params["w1"], params["b1"], w2p, b2p]

    out_pad = pl.pallas_call(
        make_fused_kernel(L, T, Bp, H),
        out_shape=jax.ShapeDtypeStruct((L * Bp, _C_PAD), jnp.float32),
        in_specs=[_VMEM] * len(inputs),
        out_specs=_VMEM,
        scratch_shapes=[
            pltpu.VMEM((T, Bp, 4 * H), jnp.float32),    # hoisted input projection (f32 acc)
            pltpu.VMEM((T, Bp, H), jnp.bfloat16),       # inter-layer hidden sequence
        ],
        compiler_params=pltpu.CompilerParams(vmem_limit_bytes=48 * 1024 * 1024),
    )(*inputs)

    # drop batch / lane padding, keep PyTorch hn.view(-1, H) row order (layer-major)
    return out_pad.reshape(L, Bp, _C_PAD)[:, :B, :C].reshape(L * B, C)


# ---------------------------------------------------------------------------
# Deterministic parameter init (fused-gate layout, PyTorch i,f,g,o block order)
# ---------------------------------------------------------------------------
def init_params(key, input_size, hidden_size, num_layers, num_classes):
    H = hidden_size
    k = 1.0 / np.sqrt(H)
    params = {"lstm": []}
    for l in range(num_layers):
        d_in = input_size if l == 0 else H
        key, k1, k2, k3, k4 = jax.random.split(key, 5)
        w_ih = jax.random.uniform(k1, (4 * H, d_in), minval=-k, maxval=k, dtype=jnp.float32)
        w_hh = jax.random.uniform(k2, (4 * H, H), minval=-k, maxval=k, dtype=jnp.float32)
        b_ih = jax.random.uniform(k3, (4 * H,), minval=-k, maxval=k, dtype=jnp.float32)
        b_hh = jax.random.uniform(k4, (4 * H,), minval=-k, maxval=k, dtype=jnp.float32)
        params["lstm"].append({
            # fused (D,4H)/(H,4H): transpose of PyTorch (4H,D)/(4H,H) keeps i|f|g|o order
            "wih": w_ih.T.astype(jnp.bfloat16),
            "whh": w_hh.T.astype(jnp.bfloat16),
            "b": (b_ih + b_hh).reshape(1, 4 * H),            # f32 combined bias
        })
    key, k1, k2, k3, k4 = jax.random.split(key, 5)
    k1s = 1.0 / np.sqrt(H)
    params["w1"] = jax.random.uniform(k1, (H, 128), minval=-k1s, maxval=k1s,
                                      dtype=jnp.float32).astype(jnp.bfloat16)
    params["b1"] = jax.random.uniform(k2, (1, 128), minval=-k1s, maxval=k1s, dtype=jnp.float32)
    k2s = 1.0 / np.sqrt(128)
    params["w2"] = jax.random.uniform(k3, (128, num_classes), minval=-k2s, maxval=k2s,
                                      dtype=jnp.float32).astype(jnp.bfloat16)
    params["b2"] = jax.random.uniform(k4, (1, num_classes), minval=-k2s, maxval=k2s,
                                      dtype=jnp.float32)
    return params


# ---------------------------------------------------------------------------
# Pure-JAX reference (same math / same bf16 matmul + f32 accumulation)
# ---------------------------------------------------------------------------
def reference_forward(x, params):
    B, T, _ = x.shape
    H = params["lstm"][0]["whh"].shape[0]
    seq = jnp.transpose(x, (1, 0, 2)).astype(jnp.float32)        # (T, B, D)
    hns = []
    for layer in params["lstm"]:
        D_l = seq.shape[-1]
        xw = (jnp.dot(seq.reshape(T * B, D_l).astype(jnp.bfloat16), layer["wih"],
                      preferred_element_type=jnp.float32)
              + layer["b"]).reshape(T, B, 4 * H)
        h = jnp.zeros((B, H), jnp.float32)
        c = jnp.zeros((B, H), jnp.float32)
        outs = []
        for t in range(T):
            pre = xw[t] + jnp.dot(h.astype(jnp.bfloat16), layer["whh"],
                                  preferred_element_type=jnp.float32)
            i = jax.nn.sigmoid(pre[:, 0:H])
            f = jax.nn.sigmoid(pre[:, H:2 * H])
            g = jnp.tanh(pre[:, 2 * H:3 * H])
            o = jax.nn.sigmoid(pre[:, 3 * H:4 * H])
            c = f * c + i * g
            h = o * jnp.tanh(c)
            outs.append(h)
        seq = jnp.stack(outs, axis=0)
        hns.append(h)
    hn = jnp.concatenate(hns, axis=0)
    z = jnp.maximum(hn, 0.0)
    z = jnp.maximum(jnp.dot(z.astype(jnp.bfloat16), params["w1"],
                            preferred_element_type=jnp.float32) + params["b1"], 0.0)
    return jnp.dot(z.astype(jnp.bfloat16), params["w2"],
                   preferred_element_type=jnp.float32) + params["b2"]


if __name__ == "__main__":
    # Small shapes consistent with LSTMModel(num_classes, input_size, hidden, layers, seq)
    batch, seq_len, input_size = 2, 8, 4
    hidden_size, num_layers, num_classes = 32, 2, 1

    key = jax.random.PRNGKey(0)
    x = jax.random.normal(key, (batch, seq_len, input_size), dtype=jnp.float32)
    params = init_params(jax.random.PRNGKey(42), input_size, hidden_size,
                         num_layers, num_classes)

    out = jax.block_until_ready(jax.jit(lstm_model_forward)(x, params))
    assert out.shape == (num_layers * batch, num_classes), out.shape

    ref = jax.block_until_ready(reference_forward(x, params))
    np.testing.assert_allclose(np.asarray(out), np.asarray(ref), rtol=2e-2, atol=2e-2)

    print("KERNEL_OK")
</pallas_src>

<mosaic_0001>
module attributes {stable_mosaic.version = 11 : i64} {
  func.func @kernel(%arg0: memref<8x8x4xbf16, #tpu.memory_space<vmem>>, %arg1: memref<4x128xbf16, #tpu.memory_space<vmem>>, %arg2: memref<32x128xbf16, #tpu.memory_space<vmem>>, %arg3: memref<1x128xf32, #tpu.memory_space<vmem>>, %arg4: memref<32x128xbf16, #tpu.memory_space<vmem>>, %arg5: memref<32x128xbf16, #tpu.memory_space<vmem>>, %arg6: memref<1x128xf32, #tpu.memory_space<vmem>>, %arg7: memref<32x128xbf16, #tpu.memory_space<vmem>>, %arg8: memref<1x128xf32, #tpu.memory_space<vmem>>, %arg9: memref<128x128xbf16, #tpu.memory_space<vmem>>, %arg10: memref<1x128xf32, #tpu.memory_space<vmem>>, %arg11: memref<16x128xf32, #tpu.memory_space<vmem>>, %arg12: memref<8x8x128xf32, #tpu.memory_space<vmem>>, %arg13: memref<8x8x32xbf16, #tpu.memory_space<vmem>>) attributes {dimension_semantics = [], scalar_prefetch = 0 : i64, scratch_operands = 2 : i64, tpu.core_type = #tpu.core_type<tc>} {
    %c0 = arith.constant 0 : index
    %c0_0 = arith.constant 0 : index
    %c0_1 = arith.constant 0 : index
    %0 = vector.load %arg0[%c0, %c0_0, %c0_1] : memref<8x8x4xbf16, #tpu.memory_space<vmem>>, vector<8x8x4xbf16>
    %1 = vector.shape_cast %0 : vector<8x8x4xbf16> to vector<64x4xbf16>
    %c0_2 = arith.constant 0 : index
    %c0_3 = arith.constant 0 : index
    %2 = vector.load %arg1[%c0_2, %c0_3] : memref<4x128xbf16, #tpu.memory_space<vmem>>, vector<4x128xbf16>
    %cst = arith.constant dense<0.000000e+00> : vector<64x128xf32>
    %3 = tpu.matmul %1, %2, %cst {dimension_numbers = #tpu.dot_dimension_numbers<[1], [0], [0], [1], [0, 0, 1, 1], [], []>} : vector<64x4xbf16>, vector<4x128xbf16>, vector<64x128xf32> -> vector<64x128xf32>
    %c0_4 = arith.constant 0 : index
    %c0_5 = arith.constant 0 : index
    %4 = vector.load %arg3[%c0_4, %c0_5] : memref<1x128xf32, #tpu.memory_space<vmem>>, vector<1x128xf32>
    %5 = vector.broadcast %4 : vector<1x128xf32> to vector<64x128xf32>
    %6 = arith.addf %3, %5 : vector<64x128xf32>
    %7 = vector.shape_cast %6 : vector<64x128xf32> to vector<8x8x128xf32>
    %c0_6 = arith.constant 0 : index
    %c0_7 = arith.constant 0 : index
    %c0_8 = arith.constant 0 : index
    %8 = vector.load %arg12[%c0_6, %c0_7, %c0_8] : memref<8x8x128xf32, #tpu.memory_space<vmem>>, vector<8x8x128xf32>
    tpu.vector_store %arg12[%c0_6, %c0_7, %c0_8], %7 {strides = array<i32>} : memref<8x8x128xf32, #tpu.memory_space<vmem>>, vector<8x8x128xf32>,
    %c0_9 = arith.constant 0 : index
    %c0_10 = arith.constant 0 : index
    %9 = vector.load %arg2[%c0_9, %c0_10] : memref<32x128xbf16, #tpu.memory_space<vmem>>, vector<32x128xbf16>
    %cst_11 = arith.constant 0.000000e+00 : f32
    %10 = vector.broadcast %cst_11 : f32 to vector<8x32xf32>
    %cst_12 = arith.constant 0.000000e+00 : f32
    %11 = vector.broadcast %cst_12 : f32 to vector<8x32xf32>
    %c0_i32 = arith.constant 0 : i32
    %12 = arith.index_cast %c0_i32 : i32 to index
    %c0_13 = arith.constant 0 : index
    %c0_14 = arith.constant 0 : index
    %13 = vector.load %arg12[%12, %c0_13, %c0_14] : memref<8x8x128xf32, #tpu.memory_space<vmem>>, vector<1x8x128xf32>
    %14 = vector.shape_cast %13 : vector<1x8x128xf32> to vector<8x128xf32>
    %15 = arith.truncf %10 : vector<8x32xf32> to vector<8x32xbf16>
    %cst_15 = arith.constant dense<0.000000e+00> : vector<8x128xf32>
    %16 = tpu.matmul %15, %9, %cst_15 {dimension_numbers = #tpu.dot_dimension_numbers<[1], [0], [0], [1], [0, 0, 1, 1], [], []>} : vector<8x32xbf16>, vector<32x128xbf16>, vector<8x128xf32> -> vector<8x128xf32>
    %17 = arith.addf %14, %16 : vector<8x128xf32>
    %18 = vector.extract_strided_slice %17 {offsets = [0, 0], sizes = [8, 32], strides = [1, 1]} : vector<8x128xf32> to vector<8x32xf32>
    %19 = arith.negf %18 : vector<8x32xf32>
    %20 = math.exp %19 : vector<8x32xf32>
    %cst_16 = arith.constant 1.000000e+00 : f32
    %21 = vector.broadcast %cst_16 : f32 to vector<8x32xf32>
    %22 = arith.addf %21, %20 : vector<8x32xf32>
    %23 = arith.divf %21, %22 : vector<8x32xf32>
    %24 = vector.extract_strided_slice %17 {offsets = [0, 32], sizes = [8, 32], strides = [1, 1]} : vector<8x128xf32> to vector<8x32xf32>
    %25 = arith.negf %24 : vector<8x32xf32>
    %26 = math.exp %25 : vector<8x32xf32>
    %cst_17 = arith.constant 1.000000e+00 : f32
    %27 = vector.broadcast %cst_17 : f32 to vector<8x32xf32>
    %28 = arith.addf %27, %26 : vector<8x32xf32>
    %29 = arith.divf %27, %28 : vector<8x32xf32>
    %30 = vector.extract_strided_slice %17 {offsets = [0, 64], sizes = [8, 32], strides = [1, 1]} : vector<8x128xf32> to vector<8x32xf32>
    %31 = math.tanh %30 : vector<8x32xf32>
    %32 = vector.extract_strided_slice %17 {offsets = [0, 96], sizes = [8, 32], strides = [1, 1]} : vector<8x128xf32> to vector<8x32xf32>
    %33 = arith.negf %32 : vector<8x32xf32>
    %34 = math.exp %33 : vector<8x32xf32>
    %cst_18 = arith.constant 1.000000e+00 : f32
    %35 = vector.broadcast %cst_18 : f32 to vector<8x32xf32>
    %36 = arith.addf %35, %34 : vector<8x32xf32>
    %37 = arith.divf %35, %36 : vector<8x32xf32>
    %38 = arith.mulf %29, %11 : vector<8x32xf32>
    %39 = arith.mulf %23, %31 : vector<8x32xf32>
    %40 = arith.addf %38, %39 : vector<8x32xf32>
    %41 = math.tanh %40 : vector<8x32xf32>
    %42 = arith.mulf %37, %41 : vector<8x32xf32>
    %43 = arith.truncf %42 : vector<8x32xf32> to vector<8x32xbf16>
    %44 = arith.index_cast %c0_i32 : i32 to index
    %c0_19 = arith.constant 0 : index
    %c0_20 = arith.constant 0 : index
    %45 = vector.load %arg13[%44, %c0_19, %c0_20] : memref<8x8x32xbf16, #tpu.memory_space<vmem>>, vector<1x8x32xbf16>
    %46 = vector.shape_cast %45 : vector<1x8x32xbf16> to vector<8x32xbf16>
    %47 = vector.shape_cast %43 : vector<8x32xbf16> to vector<1x8x32xbf16>
    tpu.vector_store %arg13[%44, %c0_19, %c0_20], %47 {strides = array<i32>} : memref<8x8x32xbf16, #tpu.memory_space<vmem>>, vector<1x8x32xbf16>,
    %c1_i32 = arith.constant 1 : i32
    %48 = arith.index_cast %c1_i32 : i32 to index
    %c0_21 = arith.constant 0 : index
    %c0_22 = arith.constant 0 : index
    %49 = vector.load %arg12[%48, %c0_21, %c0_22] : memref<8x8x128xf32, #tpu.memory_space<vmem>>, vector<1x8x128xf32>
    %50 = vector.shape_cast %49 : vector<1x8x128xf32> to vector<8x128xf32>
    %51 = arith.truncf %42 : vector<8x32xf32> to vector<8x32xbf16>
    %cst_23 = arith.constant dense<0.000000e+00> : vector<8x128xf32>
    %52 = tpu.matmul %51, %9, %cst_23 {dimension_numbers = #tpu.dot_dimension_numbers<[1], [0], [0], [1], [0, 0, 1, 1], [], []>} : vector<8x32xbf16>, vector<32x128xbf16>, vector<8x128xf32> -> vector<8x128xf32>
    %53 = arith.addf %50, %52 : vector<8x128xf32>
    %54 = vector.extract_strided_slice %53 {offsets = [0, 0], sizes = [8, 32], strides = [1, 1]} : vector<8x128xf32> to vector<8x32xf32>
    %55 = arith.negf %54 : vector<8x32xf32>
    %56 = math.exp %55 : vector<8x32xf32>
    %cst_24 = arith.constant 1.000000e+00 : f32
    %57 = vector.broadcast %cst_24 : f32 to vector<8x32xf32>
    %58 = arith.addf %57, %56 : vector<8x32xf32>
    %59 = arith.divf %57, %58 : vector<8x32xf32>
    %60 = vector.extract_strided_slice %53 {offsets = [0, 32], sizes = [8, 32], strides = [1, 1]} : vector<8x128xf32> to vector<8x32xf32>
    %61 = arith.negf %60 : vector<8x32xf32>
    %62 = math.exp %61 : vector<8x32xf32>
    %cst_25 = arith.constant 1.000000e+00 : f32
    %63 = vector.broadcast %cst_25 : f32 to vector<8x32xf32>
    %64 = arith.addf %63, %62 : vector<8x32xf32>
    %65 = arith.divf %63, %64 : vector<8x32xf32>
    %66 = vector.extract_strided_slice %53 {offsets = [0, 64], sizes = [8, 32], strides = [1, 1]} : vector<8x128xf32> to vector<8x32xf32>
    %67 = math.tanh %66 : vector<8x32xf32>
    %68 = vector.extract_strided_slice %53 {offsets = [0, 96], sizes = [8, 32], strides = [1, 1]} : vector<8x128xf32> to vector<8x32xf32>
    %69 = arith.negf %68 : vector<8x32xf32>
    %70 = math.exp %69 : vector<8x32xf32>
    %cst_26 = arith.constant 1.000000e+00 : f32
    %71 = vector.broadcast %cst_26 : f32 to vector<8x32xf32>
    %72 = arith.addf %71, %70 : vector<8x32xf32>
    %73 = arith.divf %71, %72 : vector<8x32xf32>
    %74 = arith.mulf %65, %40 : vector<8x32xf32>
    %75 = arith.mulf %59, %67 : vector<8x32xf32>
    %76 = arith.addf %74, %75 : vector<8x32xf32>
    %77 = math.tanh %76 : vector<8x32xf32>
    %78 = arith.mulf %73, %77 : vector<8x32xf32>
    %79 = arith.truncf %78 : vector<8x32xf32> to vector<8x32xbf16>
    %80 = arith.index_cast %c1_i32 : i32 to index
    %c0_27 = arith.constant 0 : index
    %c0_28 = arith.constant 0 : index
    %81 = vector.load %arg13[%80, %c0_27, %c0_28] : memref<8x8x32xbf16, #tpu.memory_space<vmem>>, vector<1x8x32xbf16>
    %82 = vector.shape_cast %81 : vector<1x8x32xbf16> to vector<8x32xbf16>
    %83 = vector.shape_cast %79 : vector<8x32xbf16> to vector<1x8x32xbf16>
    tpu.vector_store %arg13[%80, %c0_27, %c0_28], %83 {strides = array<i32>} : memref<8x8x32xbf16, #tpu.memory_space<vmem>>, vector<1x8x32xbf16>,
    %c2_i32 = arith.constant 2 : i32
    %84 = arith.index_cast %c2_i32 : i32 to index
    %c0_29 = arith.constant 0 : index
    %c0_30 = arith.constant 0 : index
    %85 = vector.load %arg12[%84, %c0_29, %c0_30] : memref<8x8x128xf32, #tpu.memory_space<vmem>>, vector<1x8x128xf32>
    %86 = vector.shape_cast %85 : vector<1x8x128xf32> to vector<8x128xf32>
    %87 = arith.truncf %78 : vector<8x32xf32> to vector<8x32xbf16>
    %cst_31 = arith.constant dense<0.000000e+00> : vector<8x128xf32>
    %88 = tpu.matmul %87, %9, %cst_31 {dimension_numbers = #tpu.dot_dimension_numbers<[1], [0], [0], [1], [0, 0, 1, 1], [], []>} : vector<8x32xbf16>, vector<32x128xbf16>, vector<8x128xf32> -> vector<8x128xf32>
    %89 = arith.addf %86, %88 : vector<8x128xf32>
    %90 = vector.extract_strided_slice %89 {offsets = [0, 0], sizes = [8, 32], strides = [1, 1]} : vector<8x128xf32> to vector<8x32xf32>
    %91 = arith.negf %90 : vector<8x32xf32>
    %92 = math.exp %91 : vector<8x32xf32>
    %cst_32 = arith.constant 1.000000e+00 : f32
    %93 = vector.broadcast %cst_32 : f32 to vector<8x32xf32>
    %94 = arith.addf %93, %92 : vector<8x32xf32>
    %95 = arith.divf %93, %94 : vector<8x32xf32>
    %96 = vector.extract_strided_slice %89 {offsets = [0, 32], sizes = [8, 32], strides = [1, 1]} : vector<8x128xf32> to vector<8x32xf32>
    %97 = arith.negf %96 : vector<8x32xf32>
    %98 = math.exp %97 : vector<8x32xf32>
    %cst_33 = arith.constant 1.000000e+00 : f32
    %99 = vector.broadcast %cst_33 : f32 to vector<8x32xf32>
    %100 = arith.addf %99, %98 : vector<8x32xf32>
    %101 = arith.divf %99, %100 : vector<8x32xf32>
    %102 = vector.extract_strided_slice %89 {offsets = [0, 64], sizes = [8, 32], strides = [1, 1]} : vector<8x128xf32> to vector<8x32xf32>
    %103 = math.tanh %102 : vector<8x32xf32>
    %104 = vector.extract_strided_slice %89 {offsets = [0, 96], sizes = [8, 32], strides = [1, 1]} : vector<8x128xf32> to vector<8x32xf32>
    %105 = arith.negf %104 : vector<8x32xf32>
    %106 = math.exp %105 : vector<8x32xf32>
    %cst_34 = arith.constant 1.000000e+00 : f32
    %107 = vector.broadcast %cst_34 : f32 to vector<8x32xf32>
    %108 = arith.addf %107, %106 : vector<8x32xf32>
    %109 = arith.divf %107, %108 : vector<8x32xf32>
    %110 = arith.mulf %101, %76 : vector<8x32xf32>
    %111 = arith.mulf %95, %103 : vector<8x32xf32>
    %112 = arith.addf %110, %111 : vector<8x32xf32>
    %113 = math.tanh %112 : vector<8x32xf32>
    %114 = arith.mulf %109, %113 : vector<8x32xf32>
    %115 = arith.truncf %114 : vector<8x32xf32> to vector<8x32xbf16>
    %116 = arith.index_cast %c2_i32 : i32 to index
    %c0_35 = arith.constant 0 : index
    %c0_36 = arith.constant 0 : index
    %117 = vector.load %arg13[%116, %c0_35, %c0_36] : memref<8x8x32xbf16, #tpu.memory_space<vmem>>, vector<1x8x32xbf16>
    %118 = vector.shape_cast %117 : vector<1x8x32xbf16> to vector<8x32xbf16>
    %119 = vector.shape_cast %115 : vector<8x32xbf16> to vector<1x8x32xbf16>
    tpu.vector_store %arg13[%116, %c0_35, %c0_36], %119 {strides = array<i32>} : memref<8x8x32xbf16, #tpu.memory_space<vmem>>, vector<1x8x32xbf16>,
    %c3_i32 = arith.constant 3 : i32
    %120 = arith.index_cast %c3_i32 : i32 to index
    %c0_37 = arith.constant 0 : index
    %c0_38 = arith.constant 0 : index
    %121 = vector.load %arg12[%120, %c0_37, %c0_38] : memref<8x8x128xf32, #tpu.memory_space<vmem>>, vector<1x8x128xf32>
    %122 = vector.shape_cast %121 : vector<1x8x128xf32> to vector<8x128xf32>
    %123 = arith.truncf %114 : vector<8x32xf32> to vector<8x32xbf16>
    %cst_39 = arith.constant dense<0.000000e+00> : vector<8x128xf32>
    %124 = tpu.matmul %123, %9, %cst_39 {dimension_numbers = #tpu.dot_dimension_numbers<[1], [0], [0], [1], [0, 0, 1, 1], [], []>} : vector<8x32xbf16>, vector<32x128xbf16>, vector<8x128xf32> -> vector<8x128xf32>
    %125 = arith.addf %122, %124 : vector<8x128xf32>
    %126 = vector.extract_strided_slice %125 {offsets = [0, 0], sizes = [8, 32], strides = [1, 1]} : vector<8x128xf32> to vector<8x32xf32>
    %127 = arith.negf %126 : vector<8x32xf32>
    %128 = math.exp %127 : vector<8x32xf32>
    %cst_40 = arith.constant 1.000000e+00 : f32
    %129 = vector.broadcast %cst_40 : f32 to vector<8x32xf32>
    %130 = arith.addf %129, %128 : vector<8x32xf32>
    %131 = arith.divf %129, %130 : vector<8x32xf32>
    %132 = vector.extract_strided_slice %125 {offsets = [0, 32], sizes = [8, 32], strides = [1, 1]} : vector<8x128xf32> to vector<8x32xf32>
    %133 = arith.negf %132 : vector<8x32xf32>
    %134 = math.exp %133 : vector<8x32xf32>
    %cst_41 = arith.constant 1.000000e+00 : f32
    %135 = vector.broadcast %cst_41 : f32 to vector<8x32xf32>
    %136 = arith.addf %135, %134 : vector<8x32xf32>
    %137 = arith.divf %135, %136 : vector<8x32xf32>
    %138 = vector.extract_strided_slice %125 {offsets = [0, 64], sizes = [8, 32], strides = [1, 1]} : vector<8x128xf32> to vector<8x32xf32>
    %139 = math.tanh %138 : vector<8x32xf32>
    %140 = vector.extract_strided_slice %125 {offsets = [0, 96], sizes = [8, 32], strides = [1, 1]} : vector<8x128xf32> to vector<8x32xf32>
    %141 = arith.negf %140 : vector<8x32xf32>
    %142 = math.exp %141 : vector<8x32xf32>
    %cst_42 = arith.constant 1.000000e+00 : f32
    %143 = vector.broadcast %cst_42 : f32 to vector<8x32xf32>
    %144 = arith.addf %143, %142 : vector<8x32xf32>
    %145 = arith.divf %143, %144 : vector<8x32xf32>
    %146 = arith.mulf %137, %112 : vector<8x32xf32>
    %147 = arith.mulf %131, %139 : vector<8x32xf32>
    %148 = arith.addf %146, %147 : vector<8x32xf32>
    %149 = math.tanh %148 : vector<8x32xf32>
    %150 = arith.mulf %145, %149 : vector<8x32xf32>
    %151 = arith.truncf %150 : vector<8x32xf32> to vector<8x32xbf16>
    %152 = arith.index_cast %c3_i32 : i32 to index
    %c0_43 = arith.constant 0 : index
    %c0_44 = arith.constant 0 : index
    %153 = vector.load %arg13[%152, %c0_43, %c0_44] : memref<8x8x32xbf16, #tpu.memory_space<vmem>>, vector<1x8x32xbf16>
    %154 = vector.shape_cast %153 : vector<1x8x32xbf16> to vector<8x32xbf16>
    %155 = vector.shape_cast %151 : vector<8x32xbf16> to vector<1x8x32xbf16>
    tpu.vector_store %arg13[%152, %c0_43, %c0_44], %155 {strides = array<i32>} : memref<8x8x32xbf16, #tpu.memory_space<vmem>>, vector<1x8x32xbf16>,
    %c4_i32 = arith.constant 4 : i32
    %156 = arith.index_cast %c4_i32 : i32 to index
    %c0_45 = arith.constant 0 : index
    %c0_46 = arith.constant 0 : index
    %157 = vector.load %arg12[%156, %c0_45, %c0_46] : memref<8x8x128xf32, #tpu.memory_space<vmem>>, vector<1x8x128xf32>
    %158 = vector.shape_cast %157 : vector<1x8x128xf32> to vector<8x128xf32>
    %159 = arith.truncf %150 : vector<8x32xf32> to vector<8x32xbf16>
    %cst_47 = arith.constant dense<0.000000e+00> : vector<8x128xf32>
    %160 = tpu.matmul %159, %9, %cst_47 {dimension_numbers = #tpu.dot_dimension_numbers<[1], [0], [0], [1], [0, 0, 1, 1], [], []>} : vector<8x32xbf16>, vector<32x128xbf16>, vector<8x128xf32> -> vector<8x128xf32>
    %161 = arith.addf %158, %160 : vector<8x128xf32>
    %162 = vector.extract_strided_slice %161 {offsets = [0, 0], sizes = [8, 32], strides = [1, 1]} : vector<8x128xf32> to vector<8x32xf32>
    %163 = arith.negf %162 : vector<8x32xf32>
    %164 = math.exp %163 : vector<8x32xf32>
    %cst_48 = arith.constant 1.000000e+00 : f32
    %165 = vector.broadcast %cst_48 : f32 to vector<8x32xf32>
    %166 = arith.addf %165, %164 : vector<8x32xf32>
    %167 = arith.divf %165, %166 : vector<8x32xf32>
    %168 = vector.extract_strided_slice %161 {offsets = [0, 32], sizes = [8, 32], strides = [1, 1]} : vector<8x128xf32> to vector<8x32xf32>
    %169 = arith.negf %168 : vector<8x32xf32>
    %170 = math.exp %169 : vector<8x32xf32>
    %cst_49 = arith.constant 1.000000e+00 : f32
    %171 = vector.broadcast %cst_49 : f32 to vector<8x32xf32>
    %172 = arith.addf %171, %170 : vector<8x32xf32>
    %173 = arith.divf %171, %172 : vector<8x32xf32>
    %174 = vector.extract_strided_slice %161 {offsets = [0, 64], sizes = [8, 32], strides = [1, 1]} : vector<8x128xf32> to vector<8x32xf32>
    %175 = math.tanh %174 : vector<8x32xf32>
    %176 = vector.extract_strided_slice %161 {offsets = [0, 96], sizes = [8, 32], strides = [1, 1]} : vector<8x128xf32> to vector<8x32xf32>
    %177 = arith.negf %176 : vector<8x32xf32>
    %178 = math.exp %177 : vector<8x32xf32>
    %cst_50 = arith.constant 1.000000e+00 : f32
    %179 = vector.broadcast %cst_50 : f32 to vector<8x32xf32>
    %180 = arith.addf %179, %178 : vector<8x32xf32>
    %181 = arith.divf %179, %180 : vector<8x32xf32>
    %182 = arith.mulf %173, %148 : vector<8x32xf32>
    %183 = arith.mulf %167, %175 : vector<8x32xf32>
    %184 = arith.addf %182, %183 : vector<8x32xf32>
    %185 = math.tanh %184 : vector<8x32xf32>
    %186 = arith.mulf %181, %185 : vector<8x32xf32>
    %187 = arith.truncf %186 : vector<8x32xf32> to vector<8x32xbf16>
    %188 = arith.index_cast %c4_i32 : i32 to index
    %c0_51 = arith.constant 0 : index
    %c0_52 = arith.constant 0 : index
    %189 = vector.load %arg13[%188, %c0_51, %c0_52] : memref<8x8x32xbf16, #tpu.memory_space<vmem>>, vector<1x8x32xbf16>
    %190 = vector.shape_cast %189 : vector<1x8x32xbf16> to vector<8x32xbf16>
    %191 = vector.shape_cast %187 : vector<8x32xbf16> to vector<1x8x32xbf16>
    tpu.vector_store %arg13[%188, %c0_51, %c0_52], %191 {strides = array<i32>} : memref<8x8x32xbf16, #tpu.memory_space<vmem>>, vector<1x8x32xbf16>,
    %c5_i32 = arith.constant 5 : i32
    %192 = arith.index_cast %c5_i32 : i32 to index
    %c0_53 = arith.constant 0 : index
    %c0_54 = arith.constant 0 : index
    %193 = vector.load %arg12[%192, %c0_53, %c0_54] : memref<8x8x128xf32, #tpu.memory_space<vmem>>, vector<1x8x128xf32>
    %194 = vector.shape_cast %193 : vector<1x8x128xf32> to vector<8x128xf32>
    %195 = arith.truncf %186 : vector<8x32xf32> to vector<8x32xbf16>
    %cst_55 = arith.constant dense<0.000000e+00> : vector<8x128xf32>
    %196 = tpu.matmul %195, %9, %cst_55 {dimension_numbers = #tpu.dot_dimension_numbers<[1], [0], [0], [1], [0, 0, 1, 1], [], []>} : vector<8x32xbf16>, vector<32x128xbf16>, vector<8x128xf32> -> vector<8x128xf32>
    %197 = arith.addf %194, %196 : vector<8x128xf32>
    %198 = vector.extract_strided_slice %197 {offsets = [0, 0], sizes = [8, 32], strides = [1, 1]} : vector<8x128xf32> to vector<8x32xf32>
    %199 = arith.negf %198 : vector<8x32xf32>
    %200 = math.exp %199 : vector<8x32xf32>
    %cst_56 = arith.constant 1.000000e+00 : f32
    %201 = vector.broadcast %cst_56 : f32 to vector<8x32xf32>
    %202 = arith.addf %201, %200 : vector<8x32xf32>
    %203 = arith.divf %201, %202 : vector<8x32xf32>
    %204 = vector.extract_strided_slice %197 {offsets = [0, 32], sizes = [8, 32], strides = [1, 1]} : vector<8x128xf32> to vector<8x32xf32>
    %205 = arith.negf %204 : vector<8x32xf32>
    %206 = math.exp %205 : vector<8x32xf32>
    %cst_57 = arith.constant 1.000000e+00 : f32
    %207 = vector.broadcast %cst_57 : f32 to vector<8x32xf32>
    %208 = arith.addf %207, %206 : vector<8x32xf32>
    %209 = arith.divf %207, %208 : vector<8x32xf32>
    %210 = vector.extract_strided_slice %197 {offsets = [0, 64], sizes = [8, 32], strides = [1, 1]} : vector<8x128xf32> to vector<8x32xf32>
    %211 = math.tanh %210 : vector<8x32xf32>
    %212 = vector.extract_strided_slice %197 {offsets = [0, 96], sizes = [8, 32], strides = [1, 1]} : vector<8x128xf32> to vector<8x32xf32>
    %213 = arith.negf %212 : vector<8x32xf32>
    %214 = math.exp %213 : vector<8x32xf32>
    %cst_58 = arith.constant 1.000000e+00 : f32
    %215 = vector.broadcast %cst_58 : f32 to vector<8x32xf32>
    %216 = arith.addf %215, %214 : vector<8x32xf32>
    %217 = arith.divf %215, %216 : vector<8x32xf32>
    %218 = arith.mulf %209, %184 : vector<8x32xf32>
    %219 = arith.mulf %203, %211 : vector<8x32xf32>
    %220 = arith.addf %218, %219 : vector<8x32xf32>
    %221 = math.tanh %220 : vector<8x32xf32>
    %222 = arith.mulf %217, %221 : vector<8x32xf32>
    %223 = arith.truncf %222 : vector<8x32xf32> to vector<8x32xbf16>
    %224 = arith.index_cast %c5_i32 : i32 to index
    %c0_59 = arith.constant 0 : index
    %c0_60 = arith.constant 0 : index
    %225 = vector.load %arg13[%224, %c0_59, %c0_60] : memref<8x8x32xbf16, #tpu.memory_space<vmem>>, vector<1x8x32xbf16>
    %226 = vector.shape_cast %225 : vector<1x8x32xbf16> to vector<8x32xbf16>
    %227 = vector.shape_cast %223 : vector<8x32xbf16> to vector<1x8x32xbf16>
    tpu.vector_store %arg13[%224, %c0_59, %c0_60], %227 {strides = array<i32>} : memref<8x8x32xbf16, #tpu.memory_space<vmem>>, vector<1x8x32xbf16>,
    %c6_i32 = arith.constant 6 : i32
    %228 = arith.index_cast %c6_i32 : i32 to index
    %c0_61 = arith.constant 0 : index
    %c0_62 = arith.constant 0 : index
    %229 = vector.load %arg12[%228, %c0_61, %c0_62] : memref<8x8x128xf32, #tpu.memory_space<vmem>>, vector<1x8x128xf32>
    %230 = vector.shape_cast %229 : vector<1x8x128xf32> to vector<8x128xf32>
    %231 = arith.truncf %222 : vector<8x32xf32> to vector<8x32xbf16>
    %cst_63 = arith.constant dense<0.000000e+00> : vector<8x128xf32>
    %232 = tpu.matmul %231, %9, %cst_63 {dimension_numbers = #tpu.dot_dimension_numbers<[1], [0], [0], [1], [0, 0, 1, 1], [], []>} : vector<8x32xbf16>, vector<32x128xbf16>, vector<8x128xf32> -> vector<8x128xf32>
    %233 = arith.addf %230, %232 : vector<8x128xf32>
    %234 = vector.extract_strided_slice %233 {offsets = [0, 0], sizes = [8, 32], strides = [1, 1]} : vector<8x128xf32> to vector<8x32xf32>
    %235 = arith.negf %234 : vector<8x32xf32>
    %236 = math.exp %235 : vector<8x32xf32>
    %cst_64 = arith.constant 1.000000e+00 : f32
    %237 = vector.broadcast %cst_64 : f32 to vector<8x32xf32>
    %238 = arith.addf %237, %236 : vector<8x32xf32>
    %239 = arith.divf %237, %238 : vector<8x32xf32>
    %240 = vector.extract_strided_slice %233 {offsets = [0, 32], sizes = [8, 32], strides = [1, 1]} : vector<8x128xf32> to vector<8x32xf32>
    %241 = arith.negf %240 : vector<8x32xf32>
    %242 = math.exp %241 : vector<8x32xf32>
    %cst_65 = arith.constant 1.000000e+00 : f32
    %243 = vector.broadcast %cst_65 : f32 to vector<8x32xf32>
    %244 = arith.addf %243, %242 : vector<8x32xf32>
    %245 = arith.divf %243, %244 : vector<8x32xf32>
    %246 = vector.extract_strided_slice %233 {offsets = [0, 64], sizes = [8, 32], strides = [1, 1]} : vector<8x128xf32> to vector<8x32xf32>
    %247 = math.tanh %246 : vector<8x32xf32>
    %248 = vector.extract_strided_slice %233 {offsets = [0, 96], sizes = [8, 32], strides = [1, 1]} : vector<8x128xf32> to vector<8x32xf32>
    %249 = arith.negf %248 : vector<8x32xf32>
    %250 = math.exp %249 : vector<8x32xf32>
    %cst_66 = arith.constant 1.000000e+00 : f32
    %251 = vector.broadcast %cst_66 : f32 to vector<8x32xf32>
    %252 = arith.addf %251, %250 : vector<8x32xf32>
    %253 = arith.divf %251, %252 : vector<8x32xf32>
    %254 = arith.mulf %245, %220 : vector<8x32xf32>
    %255 = arith.mulf %239, %247 : vector<8x32xf32>
    %256 = arith.addf %254, %255 : vector<8x32xf32>
    %257 = math.tanh %256 : vector<8x32xf32>
    %258 = arith.mulf %253, %257 : vector<8x32xf32>
    %259 = arith.truncf %258 : vector<8x32xf32> to vector<8x32xbf16>
    %260 = arith.index_cast %c6_i32 : i32 to index
    %c0_67 = arith.constant 0 : index
    %c0_68 = arith.constant 0 : index
    %261 = vector.load %arg13[%260, %c0_67, %c0_68] : memref<8x8x32xbf16, #tpu.memory_space<vmem>>, vector<1x8x32xbf16>
    %262 = vector.shape_cast %261 : vector<1x8x32xbf16> to vector<8x32xbf16>
    %263 = vector.shape_cast %259 : vector<8x32xbf16> to vector<1x8x32xbf16>
    tpu.vector_store %arg13[%260, %c0_67, %c0_68], %263 {strides = array<i32>} : memref<8x8x32xbf16, #tpu.memory_space<vmem>>, vector<1x8x32xbf16>,
    %c7_i32 = arith.constant 7 : i32
    %264 = arith.index_cast %c7_i32 : i32 to index
    %c0_69 = arith.constant 0 : index
    %c0_70 = arith.constant 0 : index
    %265 = vector.load %arg12[%264, %c0_69, %c0_70] : memref<8x8x128xf32, #tpu.memory_space<vmem>>, vector<1x8x128xf32>
    %266 = vector.shape_cast %265 : vector<1x8x128xf32> to vector<8x128xf32>
    %267 = arith.truncf %258 : vector<8x32xf32> to vector<8x32xbf16>
    %cst_71 = arith.constant dense<0.000000e+00> : vector<8x128xf32>
    %268 = tpu.matmul %267, %9, %cst_71 {dimension_numbers = #tpu.dot_dimension_numbers<[1], [0], [0], [1], [0, 0, 1, 1], [], []>} : vector<8x32xbf16>, vector<32x128xbf16>, vector<8x128xf32> -> vector<8x128xf32>
    %269 = arith.addf %266, %268 : vector<8x128xf32>
    %270 = vector.extract_strided_slice %269 {offsets = [0, 0], sizes = [8, 32], strides = [1, 1]} : vector<8x128xf32> to vector<8x32xf32>
    %271 = arith.negf %270 : vector<8x32xf32>
    %272 = math.exp %271 : vector<8x32xf32>
    %cst_72 = arith.constant 1.000000e+00 : f32
    %273 = vector.broadcast %cst_72 : f32 to vector<8x32xf32>
    %274 = arith.addf %273, %272 : vector<8x32xf32>
    %275 = arith.divf %273, %274 : vector<8x32xf32>
    %276 = vector.extract_strided_slice %269 {offsets = [0, 32], sizes = [8, 32], strides = [1, 1]} : vector<8x128xf32> to vector<8x32xf32>
    %277 = arith.negf %276 : vector<8x32xf32>
    %278 = math.exp %277 : vector<8x32xf32>
    %cst_73 = arith.constant 1.000000e+00 : f32
    %279 = vector.broadcast %cst_73 : f32 to vector<8x32xf32>
    %280 = arith.addf %279, %278 : vector<8x32xf32>
    %281 = arith.divf %279, %280 : vector<8x32xf32>
    %282 = vector.extract_strided_slice %269 {offsets = [0, 64], sizes = [8, 32], strides = [1, 1]} : vector<8x128xf32> to vector<8x32xf32>
    %283 = math.tanh %282 : vector<8x32xf32>
    %284 = vector.extract_strided_slice %269 {offsets = [0, 96], sizes = [8, 32], strides = [1, 1]} : vector<8x128xf32> to vector<8x32xf32>
    %285 = arith.negf %284 : vector<8x32xf32>
    %286 = math.exp %285 : vector<8x32xf32>
    %cst_74 = arith.constant 1.000000e+00 : f32
    %287 = vector.broadcast %cst_74 : f32 to vector<8x32xf32>
    %288 = arith.addf %287, %286 : vector<8x32xf32>
    %289 = arith.divf %287, %288 : vector<8x32xf32>
    %290 = arith.mulf %281, %256 : vector<8x32xf32>
    %291 = arith.mulf %275, %283 : vector<8x32xf32>
    %292 = arith.addf %290, %291 : vector<8x32xf32>
    %293 = math.tanh %292 : vector<8x32xf32>
    %294 = arith.mulf %289, %293 : vector<8x32xf32>
    %295 = arith.truncf %294 : vector<8x32xf32> to vector<8x32xbf16>
    %296 = arith.index_cast %c7_i32 : i32 to index
    %c0_75 = arith.constant 0 : index
    %c0_76 = arith.constant 0 : index
    %297 = vector.load %arg13[%296, %c0_75, %c0_76] : memref<8x8x32xbf16, #tpu.memory_space<vmem>>, vector<1x8x32xbf16>
    %298 = vector.shape_cast %297 : vector<1x8x32xbf16> to vector<8x32xbf16>
    %299 = vector.shape_cast %295 : vector<8x32xbf16> to vector<1x8x32xbf16>
    tpu.vector_store %arg13[%296, %c0_75, %c0_76], %299 {strides = array<i32>} : memref<8x8x32xbf16, #tpu.memory_space<vmem>>, vector<1x8x32xbf16>,
    %c8_i32 = arith.constant 8 : i32
    %c0_77 = arith.constant 0 : index
    %c0_78 = arith.constant 0 : index
    %c0_79 = arith.constant 0 : index
    %300 = vector.load %arg13[%c0_77, %c0_78, %c0_79] : memref<8x8x32xbf16, #tpu.memory_space<vmem>>, vector<8x8x32xbf16>
    %301 = vector.shape_cast %300 : vector<8x8x32xbf16> to vector<64x32xbf16>
    %c0_80 = arith.constant 0 : index
    %c0_81 = arith.constant 0 : index
    %302 = vector.load %arg4[%c0_80, %c0_81] : memref<32x128xbf16, #tpu.memory_space<vmem>>, vector<32x128xbf16>
    %cst_82 = arith.constant dense<0.000000e+00> : vector<64x128xf32>
    %303 = tpu.matmul %301, %302, %cst_82 {dimension_numbers = #tpu.dot_dimension_numbers<[1], [0], [0], [1], [0, 0, 1, 1], [], []>} : vector<64x32xbf16>, vector<32x128xbf16>, vector<64x128xf32> -> vector<64x128xf32>
    %c0_83 = arith.constant 0 : index
    %c0_84 = arith.constant 0 : index
    %304 = vector.load %arg6[%c0_83, %c0_84] : memref<1x128xf32, #tpu.memory_space<vmem>>, vector<1x128xf32>
    %305 = vector.broadcast %304 : vector<1x128xf32> to vector<64x128xf32>
    %306 = arith.addf %303, %305 : vector<64x128xf32>
    %307 = vector.shape_cast %306 : vector<64x128xf32> to vector<8x8x128xf32>
    %c0_85 = arith.constant 0 : index
    %c0_86 = arith.constant 0 : index
    %c0_87 = arith.constant 0 : index
    %308 = vector.load %arg12[%c0_85, %c0_86, %c0_87] : memref<8x8x128xf32, #tpu.memory_space<vmem>>, vector<8x8x128xf32>
    tpu.vector_store %arg12[%c0_85, %c0_86, %c0_87], %307 {strides = array<i32>} : memref<8x8x128xf32, #tpu.memory_space<vmem>>, vector<8x8x128xf32>,
    %c0_88 = arith.constant 0 : index
    %c0_89 = arith.constant 0 : index
    %309 = vector.load %arg5[%c0_88, %c0_89] : memref<32x128xbf16, #tpu.memory_space<vmem>>, vector<32x128xbf16>
    %cst_90 = arith.constant 0.000000e+00 : f32
    %310 = vector.broadcast %cst_90 : f32 to vector<8x32xf32>
    %cst_91 = arith.constant 0.000000e+00 : f32
    %311 = vector.broadcast %cst_91 : f32 to vector<8x32xf32>
    %c0_i32_92 = arith.constant 0 : i32
    %312 = arith.index_cast %c0_i32_92 : i32 to index
    %c0_93 = arith.constant 0 : index
    %c0_94 = arith.constant 0 : index
    %313 = vector.load %arg12[%312, %c0_93, %c0_94] : memref<8x8x128xf32, #tpu.memory_space<vmem>>, vector<1x8x128xf32>
    %314 = vector.shape_cast %313 : vector<1x8x128xf32> to vector<8x128xf32>
    %315 = arith.truncf %310 : vector<8x32xf32> to vector<8x32xbf16>
    %cst_95 = arith.constant dense<0.000000e+00> : vector<8x128xf32>
    %316 = tpu.matmul %315, %309, %cst_95 {dimension_numbers = #tpu.dot_dimension_numbers<[1], [0], [0], [1], [0, 0, 1, 1], [], []>} : vector<8x32xbf16>, vector<32x128xbf16>, vector<8x128xf32> -> vector<8x128xf32>
    %317 = arith.addf %314, %316 : vector<8x128xf32>
    %318 = vector.extract_strided_slice %317 {offsets = [0, 0], sizes = [8, 32], strides = [1, 1]} : vector<8x128xf32> to vector<8x32xf32>
    %319 = arith.negf %318 : vector<8x32xf32>
    %320 = math.exp %319 : vector<8x32xf32>
    %cst_96 = arith.constant 1.000000e+00 : f32
    %321 = vector.broadcast %cst_96 : f32 to vector<8x32xf32>
    %322 = arith.addf %321, %320 : vector<8x32xf32>
    %323 = arith.divf %321, %322 : vector<8x32xf32>
    %324 = vector.extract_strided_slice %317 {offsets = [0, 32], sizes = [8, 32], strides = [1, 1]} : vector<8x128xf32> to vector<8x32xf32>
    %325 = arith.negf %324 : vector<8x32xf32>
    %326 = math.exp %325 : vector<8x32xf32>
    %cst_97 = arith.constant 1.000000e+00 : f32
    %327 = vector.broadcast %cst_97 : f32 to vector<8x32xf32>
    %328 = arith.addf %327, %326 : vector<8x32xf32>
    %329 = arith.divf %327, %328 : vector<8x32xf32>
    %330 = vector.extract_strided_slice %317 {offsets = [0, 64], sizes = [8, 32], strides = [1, 1]} : vector<8x128xf32> to vector<8x32xf32>
    %331 = math.tanh %330 : vector<8x32xf32>
    %332 = vector.extract_strided_slice %317 {offsets = [0, 96], sizes = [8, 32], strides = [1, 1]} : vector<8x128xf32> to vector<8x32xf32>
    %333 = arith.negf %332 : vector<8x32xf32>
    %334 = math.exp %333 : vector<8x32xf32>
    %cst_98 = arith.constant 1.000000e+00 : f32
    %335 = vector.broadcast %cst_98 : f32 to vector<8x32xf32>
    %336 = arith.addf %335, %334 : vector<8x32xf32>
    %337 = arith.divf %335, %336 : vector<8x32xf32>
    %338 = arith.mulf %329, %311 : vector<8x32xf32>
    %339 = arith.mulf %323, %331 : vector<8x32xf32>
    %340 = arith.addf %338, %339 : vector<8x32xf32>
    %341 = math.tanh %340 : vector<8x32xf32>
    %342 = arith.mulf %337, %341 : vector<8x32xf32>
    %c1_i32_99 = arith.constant 1 : i32
    %343 = arith.index_cast %c1_i32_99 : i32 to index
    %c0_100 = arith.constant 0 : index
    %c0_101 = arith.constant 0 : index
    %344 = vector.load %arg12[%343, %c0_100, %c0_101] : memref<8x8x128xf32, #tpu.memory_space<vmem>>, vector<1x8x128xf32>
    %345 = vector.shape_cast %344 : vector<1x8x128xf32> to vector<8x128xf32>
    %346 = arith.truncf %342 : vector<8x32xf32> to vector<8x32xbf16>
    %cst_102 = arith.constant dense<0.000000e+00> : vector<8x128xf32>
    %347 = tpu.matmul %346, %309, %cst_102 {dimension_numbers = #tpu.dot_dimension_numbers<[1], [0], [0], [1], [0, 0, 1, 1], [], []>} : vector<8x32xbf16>, vector<32x128xbf16>, vector<8x128xf32> -> vector<8x128xf32>
    %348 = arith.addf %345, %347 : vector<8x128xf32>
    %349 = vector.extract_strided_slice %348 {offsets = [0, 0], sizes = [8, 32], strides = [1, 1]} : vector<8x128xf32> to vector<8x32xf32>
    %350 = arith.negf %349 : vector<8x32xf32>
    %351 = math.exp %350 : vector<8x32xf32>
    %cst_103 = arith.constant 1.000000e+00 : f32
    %352 = vector.broadcast %cst_103 : f32 to vector<8x32xf32>
    %353 = arith.addf %352, %351 : vector<8x32xf32>
    %354 = arith.divf %352, %353 : vector<8x32xf32>
    %355 = vector.extract_strided_slice %348 {offsets = [0, 32], sizes = [8, 32], strides = [1, 1]} : vector<8x128xf32> to vector<8x32xf32>
    %356 = arith.negf %355 : vector<8x32xf32>
    %357 = math.exp %356 : vector<8x32xf32>
    %cst_104 = arith.constant 1.000000e+00 : f32
    %358 = vector.broadcast %cst_104 : f32 to vector<8x32xf32>
    %359 = arith.addf %358, %357 : vector<8x32xf32>
    %360 = arith.divf %358, %359 : vector<8x32xf32>
    %361 = vector.extract_strided_slice %348 {offsets = [0, 64], sizes = [8, 32], strides = [1, 1]} : vector<8x128xf32> to vector<8x32xf32>
    %362 = math.tanh %361 : vector<8x32xf32>
    %363 = vector.extract_strided_slice %348 {offsets = [0, 96], sizes = [8, 32], strides = [1, 1]} : vector<8x128xf32> to vector<8x32xf32>
    %364 = arith.negf %363 : vector<8x32xf32>
    %365 = math.exp %364 : vector<8x32xf32>
    %cst_105 = arith.constant 1.000000e+00 : f32
    %366 = vector.broadcast %cst_105 : f32 to vector<8x32xf32>
    %367 = arith.addf %366, %365 : vector<8x32xf32>
    %368 = arith.divf %366, %367 : vector<8x32xf32>
    %369 = arith.mulf %360, %340 : vector<8x32xf32>
    %370 = arith.mulf %354, %362 : vector<8x32xf32>
    %371 = arith.addf %369, %370 : vector<8x32xf32>
    %372 = math.tanh %371 : vector<8x32xf32>
    %373 = arith.mulf %368, %372 : vector<8x32xf32>
    %c2_i32_106 = arith.constant 2 : i32
    %374 = arith.index_cast %c2_i32_106 : i32 to index
    %c0_107 = arith.constant 0 : index
    %c0_108 = arith.constant 0 : index
    %375 = vector.load %arg12[%374, %c0_107, %c0_108] : memref<8x8x128xf32, #tpu.memory_space<vmem>>, vector<1x8x128xf32>
    %376 = vector.shape_cast %375 : vector<1x8x128xf32> to vector<8x128xf32>
    %377 = arith.truncf %373 : vector<8x32xf32> to vector<8x32xbf16>
    %cst_109 = arith.constant dense<0.000000e+00> : vector<8x128xf32>
    %378 = tpu.matmul %377, %309, %cst_109 {dimension_numbers = #tpu.dot_dimension_numbers<[1], [0], [0], [1], [0, 0, 1, 1], [], []>} : vector<8x32xbf16>, vector<32x128xbf16>, vector<8x128xf32> -> vector<8x128xf32>
    %379 = arith.addf %376, %378 : vector<8x128xf32>
    %380 = vector.extract_strided_slice %379 {offsets = [0, 0], sizes = [8, 32], strides = [1, 1]} : vector<8x128xf32> to vector<8x32xf32>
    %381 = arith.negf %380 : vector<8x32xf32>
    %382 = math.exp %381 : vector<8x32xf32>
    %cst_110 = arith.constant 1.000000e+00 : f32
    %383 = vector.broadcast %cst_110 : f32 to vector<8x32xf32>
    %384 = arith.addf %383, %382 : vector<8x32xf32>
    %385 = arith.divf %383, %384 : vector<8x32xf32>
    %386 = vector.extract_strided_slice %379 {offsets = [0, 32], sizes = [8, 32], strides = [1, 1]} : vector<8x128xf32> to vector<8x32xf32>
    %387 = arith.negf %386 : vector<8x32xf32>
    %388 = math.exp %387 : vector<8x32xf32>
    %cst_111 = arith.constant 1.000000e+00 : f32
    %389 = vector.broadcast %cst_111 : f32 to vector<8x32xf32>
    %390 = arith.addf %389, %388 : vector<8x32xf32>
    %391 = arith.divf %389, %390 : vector<8x32xf32>
    %392 = vector.extract_strided_slice %379 {offsets = [0, 64], sizes = [8, 32], strides = [1, 1]} : vector<8x128xf32> to vector<8x32xf32>
    %393 = math.tanh %392 : vector<8x32xf32>
    %394 = vector.extract_strided_slice %379 {offsets = [0, 96], sizes = [8, 32], strides = [1, 1]} : vector<8x128xf32> to vector<8x32xf32>
    %395 = arith.negf %394 : vector<8x32xf32>
    %396 = math.exp %395 : vector<8x32xf32>
    %cst_112 = arith.constant 1.000000e+00 : f32
    %397 = vector.broadcast %cst_112 : f32 to vector<8x32xf32>
    %398 = arith.addf %397, %396 : vector<8x32xf32>
    %399 = arith.divf %397, %398 : vector<8x32xf32>
    %400 = arith.mulf %391, %371 : vector<8x32xf32>
    %401 = arith.mulf %385, %393 : vector<8x32xf32>
    %402 = arith.addf %400, %401 : vector<8x32xf32>
    %403 = math.tanh %402 : vector<8x32xf32>
    %404 = arith.mulf %399, %403 : vector<8x32xf32>
    %c3_i32_113 = arith.constant 3 : i32
    %405 = arith.index_cast %c3_i32_113 : i32 to index
    %c0_114 = arith.constant 0 : index
    %c0_115 = arith.constant 0 : index
    %406 = vector.load %arg12[%405, %c0_114, %c0_115] : memref<8x8x128xf32, #tpu.memory_space<vmem>>, vector<1x8x128xf32>
    %407 = vector.shape_cast %406 : vector<1x8x128xf32> to vector<8x128xf32>
    %408 = arith.truncf %404 : vector<8x32xf32> to vector<8x32xbf16>
    %cst_116 = arith.constant dense<0.000000e+00> : vector<8x128xf32>
    %409 = tpu.matmul %408, %309, %cst_116 {dimension_numbers = #tpu.dot_dimension_numbers<[1], [0], [0], [1], [0, 0, 1, 1], [], []>} : vector<8x32xbf16>, vector<32x128xbf16>, vector<8x128xf32> -> vector<8x128xf32>
    %410 = arith.addf %407, %409 : vector<8x128xf32>
    %411 = vector.extract_strided_slice %410 {offsets = [0, 0], sizes = [8, 32], strides = [1, 1]} : vector<8x128xf32> to vector<8x32xf32>
    %412 = arith.negf %411 : vector<8x32xf32>
    %413 = math.exp %412 : vector<8x32xf32>
    %cst_117 = arith.constant 1.000000e+00 : f32
    %414 = vector.broadcast %cst_117 : f32 to vector<8x32xf32>
    %415 = arith.addf %414, %413 : vector<8x32xf32>
    %416 = arith.divf %414, %415 : vector<8x32xf32>
    %417 = vector.extract_strided_slice %410 {offsets = [0, 32], sizes = [8, 32], strides = [1, 1]} : vector<8x128xf32> to vector<8x32xf32>
    %418 = arith.negf %417 : vector<8x32xf32>
    %419 = math.exp %418 : vector<8x32xf32>
    %cst_118 = arith.constant 1.000000e+00 : f32
    %420 = vector.broadcast %cst_118 : f32 to vector<8x32xf32>
    %421 = arith.addf %420, %419 : vector<8x32xf32>
    %422 = arith.divf %420, %421 : vector<8x32xf32>
    %423 = vector.extract_strided_slice %410 {offsets = [0, 64], sizes = [8, 32], strides = [1, 1]} : vector<8x128xf32> to vector<8x32xf32>
    %424 = math.tanh %423 : vector<8x32xf32>
    %425 = vector.extract_strided_slice %410 {offsets = [0, 96], sizes = [8, 32], strides = [1, 1]} : vector<8x128xf32> to vector<8x32xf32>
    %426 = arith.negf %425 : vector<8x32xf32>
    %427 = math.exp %426 : vector<8x32xf32>
    %cst_119 = arith.constant 1.000000e+00 : f32
    %428 = vector.broadcast %cst_119 : f32 to vector<8x32xf32>
    %429 = arith.addf %428, %427 : vector<8x32xf32>
    %430 = arith.divf %428, %429 : vector<8x32xf32>
    %431 = arith.mulf %422, %402 : vector<8x32xf32>
    %432 = arith.mulf %416, %424 : vector<8x32xf32>
    %433 = arith.addf %431, %432 : vector<8x32xf32>
    %434 = math.tanh %433 : vector<8x32xf32>
    %435 = arith.mulf %430, %434 : vector<8x32xf32>
    %c4_i32_120 = arith.constant 4 : i32
    %436 = arith.index_cast %c4_i32_120 : i32 to index
    %c0_121 = arith.constant 0 : index
    %c0_122 = arith.constant 0 : index
    %437 = vector.load %arg12[%436, %c0_121, %c0_122] : memref<8x8x128xf32, #tpu.memory_space<vmem>>, vector<1x8x128xf32>
    %438 = vector.shape_cast %437 : vector<1x8x128xf32> to vector<8x128xf32>
    %439 = arith.truncf %435 : vector<8x32xf32> to vector<8x32xbf16>
    %cst_123 = arith.constant dense<0.000000e+00> : vector<8x128xf32>
    %440 = tpu.matmul %439, %309, %cst_123 {dimension_numbers = #tpu.dot_dimension_numbers<[1], [0], [0], [1], [0, 0, 1, 1], [], []>} : vector<8x32xbf16>, vector<32x128xbf16>, vector<8x128xf32> -> vector<8x128xf32>
    %441 = arith.addf %438, %440 : vector<8x128xf32>
    %442 = vector.extract_strided_slice %441 {offsets = [0, 0], sizes = [8, 32], strides = [1, 1]} : vector<8x128xf32> to vector<8x32xf32>
    %443 = arith.negf %442 : vector<8x32xf32>
    %444 = math.exp %443 : vector<8x32xf32>
    %cst_124 = arith.constant 1.000000e+00 : f32
    %445 = vector.broadcast %cst_124 : f32 to vector<8x32xf32>
    %446 = arith.addf %445, %444 : vector<8x32xf32>
    %447 = arith.divf %445, %446 : vector<8x32xf32>
    %448 = vector.extract_strided_slice %441 {offsets = [0, 32], sizes = [8, 32], strides = [1, 1]} : vector<8x128xf32> to vector<8x32xf32>
    %449 = arith.negf %448 : vector<8x32xf32>
    %450 = math.exp %449 : vector<8x32xf32>
    %cst_125 = arith.constant 1.000000e+00 : f32
    %451 = vector.broadcast %cst_125 : f32 to vector<8x32xf32>
    %452 = arith.addf %451, %450 : vector<8x32xf32>
    %453 = arith.divf %451, %452 : vector<8x32xf32>
    %454 = vector.extract_strided_slice %441 {offsets = [0, 64], sizes = [8, 32], strides = [1, 1]} : vector<8x128xf32> to vector<8x32xf32>
    %455 = math.tanh %454 : vector<8x32xf32>
    %456 = vector.extract_strided_slice %441 {offsets = [0, 96], sizes = [8, 32], strides = [1, 1]} : vector<8x128xf32> to vector<8x32xf32>
    %457 = arith.negf %456 : vector<8x32xf32>
    %458 = math.exp %457 : vector<8x32xf32>
    %cst_126 = arith.constant 1.000000e+00 : f32
    %459 = vector.broadcast %cst_126 : f32 to vector<8x32xf32>
    %460 = arith.addf %459, %458 : vector<8x32xf32>
    %461 = arith.divf %459, %460 : vector<8x32xf32>
    %462 = arith.mulf %453, %433 : vector<8x32xf32>
    %463 = arith.mulf %447, %455 : vector<8x32xf32>
    %464 = arith.addf %462, %463 : vector<8x32xf32>
    %465 = math.tanh %464 : vector<8x32xf32>
    %466 = arith.mulf %461, %465 : vector<8x32xf32>
    %c5_i32_127 = arith.constant 5 : i32
    %467 = arith.index_cast %c5_i32_127 : i32 to index
    %c0_128 = arith.constant 0 : index
    %c0_129 = arith.constant 0 : index
    %468 = vector.load %arg12[%467, %c0_128, %c0_129] : memref<8x8x128xf32, #tpu.memory_space<vmem>>, vector<1x8x128xf32>
    %469 = vector.shape_cast %468 : vector<1x8x128xf32> to vector<8x128xf32>
    %470 = arith.truncf %466 : vector<8x32xf32> to vector<8x32xbf16>
    %cst_130 = arith.constant dense<0.000000e+00> : vector<8x128xf32>
    %471 = tpu.matmul %470, %309, %cst_130 {dimension_numbers = #tpu.dot_dimension_numbers<[1], [0], [0], [1], [0, 0, 1, 1], [], []>} : vector<8x32xbf16>, vector<32x128xbf16>, vector<8x128xf32> -> vector<8x128xf32>
    %472 = arith.addf %469, %471 : vector<8x128xf32>
    %473 = vector.extract_strided_slice %472 {offsets = [0, 0], sizes = [8, 32], strides = [1, 1]} : vector<8x128xf32> to vector<8x32xf32>
    %474 = arith.negf %473 : vector<8x32xf32>
    %475 = math.exp %474 : vector<8x32xf32>
    %cst_131 = arith.constant 1.000000e+00 : f32
    %476 = vector.broadcast %cst_131 : f32 to vector<8x32xf32>
    %477 = arith.addf %476, %475 : vector<8x32xf32>
    %478 = arith.divf %476, %477 : vector<8x32xf32>
    %479 = vector.extract_strided_slice %472 {offsets = [0, 32], sizes = [8, 32], strides = [1, 1]} : vector<8x128xf32> to vector<8x32xf32>
    %480 = arith.negf %479 : vector<8x32xf32>
    %481 = math.exp %480 : vector<8x32xf32>
    %cst_132 = arith.constant 1.000000e+00 : f32
    %482 = vector.broadcast %cst_132 : f32 to vector<8x32xf32>
    %483 = arith.addf %482, %481 : vector<8x32xf32>
    %484 = arith.divf %482, %483 : vector<8x32xf32>
    %485 = vector.extract_strided_slice %472 {offsets = [0, 64], sizes = [8, 32], strides = [1, 1]} : vector<8x128xf32> to vector<8x32xf32>
    %486 = math.tanh %485 : vector<8x32xf32>
    %487 = vector.extract_strided_slice %472 {offsets = [0, 96], sizes = [8, 32], strides = [1, 1]} : vector<8x128xf32> to vector<8x32xf32>
    %488 = arith.negf %487 : vector<8x32xf32>
    %489 = math.exp %488 : vector<8x32xf32>
    %cst_133 = arith.constant 1.000000e+00 : f32
    %490 = vector.broadcast %cst_133 : f32 to vector<8x32xf32>
    %491 = arith.addf %490, %489 : vector<8x32xf32>
    %492 = arith.divf %490, %491 : vector<8x32xf32>
    %493 = arith.mulf %484, %464 : vector<8x32xf32>
    %494 = arith.mulf %478, %486 : vector<8x32xf32>
    %495 = arith.addf %493, %494 : vector<8x32xf32>
    %496 = math.tanh %495 : vector<8x32xf32>
    %497 = arith.mulf %492, %496 : vector<8x32xf32>
    %c6_i32_134 = arith.constant 6 : i32
    %498 = arith.index_cast %c6_i32_134 : i32 to index
    %c0_135 = arith.constant 0 : index
    %c0_136 = arith.constant 0 : index
    %499 = vector.load %arg12[%498, %c0_135, %c0_136] : memref<8x8x128xf32, #tpu.memory_space<vmem>>, vector<1x8x128xf32>
    %500 = vector.shape_cast %499 : vector<1x8x128xf32> to vector<8x128xf32>
    %501 = arith.truncf %497 : vector<8x32xf32> to vector<8x32xbf16>
    %cst_137 = arith.constant dense<0.000000e+00> : vector<8x128xf32>
    %502 = tpu.matmul %501, %309, %cst_137 {dimension_numbers = #tpu.dot_dimension_numbers<[1], [0], [0], [1], [0, 0, 1, 1], [], []>} : vector<8x32xbf16>, vector<32x128xbf16>, vector<8x128xf32> -> vector<8x128xf32>
    %503 = arith.addf %500, %502 : vector<8x128xf32>
    %504 = vector.extract_strided_slice %503 {offsets = [0, 0], sizes = [8, 32], strides = [1, 1]} : vector<8x128xf32> to vector<8x32xf32>
    %505 = arith.negf %504 : vector<8x32xf32>
    %506 = math.exp %505 : vector<8x32xf32>
    %cst_138 = arith.constant 1.000000e+00 : f32
    %507 = vector.broadcast %cst_138 : f32 to vector<8x32xf32>
    %508 = arith.addf %507, %506 : vector<8x32xf32>
    %509 = arith.divf %507, %508 : vector<8x32xf32>
    %510 = vector.extract_strided_slice %503 {offsets = [0, 32], sizes = [8, 32], strides = [1, 1]} : vector<8x128xf32> to vector<8x32xf32>
    %511 = arith.negf %510 : vector<8x32xf32>
    %512 = math.exp %511 : vector<8x32xf32>
    %cst_139 = arith.constant 1.000000e+00 : f32
    %513 = vector.broadcast %cst_139 : f32 to vector<8x32xf32>
    %514 = arith.addf %513, %512 : vector<8x32xf32>
    %515 = arith.divf %513, %514 : vector<8x32xf32>
    %516 = vector.extract_strided_slice %503 {offsets = [0, 64], sizes = [8, 32], strides = [1, 1]} : vector<8x128xf32> to vector<8x32xf32>
    %517 = math.tanh %516 : vector<8x32xf32>
    %518 = vector.extract_strided_slice %503 {offsets = [0, 96], sizes = [8, 32], strides = [1, 1]} : vector<8x128xf32> to vector<8x32xf32>
    %519 = arith.negf %518 : vector<8x32xf32>
    %520 = math.exp %519 : vector<8x32xf32>
    %cst_140 = arith.constant 1.000000e+00 : f32
    %521 = vector.broadcast %cst_140 : f32 to vector<8x32xf32>
    %522 = arith.addf %521, %520 : vector<8x32xf32>
    %523 = arith.divf %521, %522 : vector<8x32xf32>
    %524 = arith.mulf %515, %495 : vector<8x32xf32>
    %525 = arith.mulf %509, %517 : vector<8x32xf32>
    %526 = arith.addf %524, %525 : vector<8x32xf32>
    %527 = math.tanh %526 : vector<8x32xf32>
    %528 = arith.mulf %523, %527 : vector<8x32xf32>
    %c7_i32_141 = arith.constant 7 : i32
    %529 = arith.index_cast %c7_i32_141 : i32 to index
    %c0_142 = arith.constant 0 : index
    %c0_143 = arith.constant 0 : index
    %530 = vector.load %arg12[%529, %c0_142, %c0_143] : memref<8x8x128xf32, #tpu.memory_space<vmem>>, vector<1x8x128xf32>
    %531 = vector.shape_cast %530 : vector<1x8x128xf32> to vector<8x128xf32>
    %532 = arith.truncf %528 : vector<8x32xf32> to vector<8x32xbf16>
    %cst_144 = arith.constant dense<0.000000e+00> : vector<8x128xf32>
    %533 = tpu.matmul %532, %309, %cst_144 {dimension_numbers = #tpu.dot_dimension_numbers<[1], [0], [0], [1], [0, 0, 1, 1], [], []>} : vector<8x32xbf16>, vector<32x128xbf16>, vector<8x128xf32> -> vector<8x128xf32>
    %534 = arith.addf %531, %533 : vector<8x128xf32>
    %535 = vector.extract_strided_slice %534 {offsets = [0, 0], sizes = [8, 32], strides = [1, 1]} : vector<8x128xf32> to vector<8x32xf32>
    %536 = arith.negf %535 : vector<8x32xf32>
    %537 = math.exp %536 : vector<8x32xf32>
    %cst_145 = arith.constant 1.000000e+00 : f32
    %538 = vector.broadcast %cst_145 : f32 to vector<8x32xf32>
    %539 = arith.addf %538, %537 : vector<8x32xf32>
    %540 = arith.divf %538, %539 : vector<8x32xf32>
    %541 = vector.extract_strided_slice %534 {offsets = [0, 32], sizes = [8, 32], strides = [1, 1]} : vector<8x128xf32> to vector<8x32xf32>
    %542 = arith.negf %541 : vector<8x32xf32>
    %543 = math.exp %542 : vector<8x32xf32>
    %cst_146 = arith.constant 1.000000e+00 : f32
    %544 = vector.broadcast %cst_146 : f32 to vector<8x32xf32>
    %545 = arith.addf %544, %543 : vector<8x32xf32>
    %546 = arith.divf %544, %545 : vector<8x32xf32>
    %547 = vector.extract_strided_slice %534 {offsets = [0, 64], sizes = [8, 32], strides = [1, 1]} : vector<8x128xf32> to vector<8x32xf32>
    %548 = math.tanh %547 : vector<8x32xf32>
    %549 = vector.extract_strided_slice %534 {offsets = [0, 96], sizes = [8, 32], strides = [1, 1]} : vector<8x128xf32> to vector<8x32xf32>
    %550 = arith.negf %549 : vector<8x32xf32>
    %551 = math.exp %550 : vector<8x32xf32>
    %cst_147 = arith.constant 1.000000e+00 : f32
    %552 = vector.broadcast %cst_147 : f32 to vector<8x32xf32>
    %553 = arith.addf %552, %551 : vector<8x32xf32>
    %554 = arith.divf %552, %553 : vector<8x32xf32>
    %555 = arith.mulf %546, %526 : vector<8x32xf32>
    %556 = arith.mulf %540, %548 : vector<8x32xf32>
    %557 = arith.addf %555, %556 : vector<8x32xf32>
    %558 = math.tanh %557 : vector<8x32xf32>
    %559 = arith.mulf %554, %558 : vector<8x32xf32>
    %c8_i32_148 = arith.constant 8 : i32
    %560 = tpu.concatenate %294, %559 in 0 : vector<8x32xf32>, vector<8x32xf32> -> vector<16x32xf32>
    %cst_149 = arith.constant 0.000000e+00 : f32
    %561 = vector.broadcast %cst_149 : f32 to vector<16x32xf32>
    %562 = arith.maximumf %560, %561 : vector<16x32xf32>
    %563 = arith.truncf %562 : vector<16x32xf32> to vector<16x32xbf16>
    %c0_150 = arith.constant 0 : index
    %c0_151 = arith.constant 0 : index
    %564 = vector.load %arg7[%c0_150, %c0_151] : memref<32x128xbf16, #tpu.memory_space<vmem>>, vector<32x128xbf16>
    %cst_152 = arith.constant dense<0.000000e+00> : vector<16x128xf32>
    %565 = tpu.matmul %563, %564, %cst_152 {dimension_numbers = #tpu.dot_dimension_numbers<[1], [0], [0], [1], [0, 0, 1, 1], [], []>} : vector<16x32xbf16>, vector<32x128xbf16>, vector<16x128xf32> -> vector<16x128xf32>
    %c0_153 = arith.constant 0 : index
    %c0_154 = arith.constant 0 : index
    %566 = vector.load %arg8[%c0_153, %c0_154] : memref<1x128xf32, #tpu.memory_space<vmem>>, vector<1x128xf32>
    %567 = vector.broadcast %566 : vector<1x128xf32> to vector<16x128xf32>
    %568 = arith.addf %565, %567 : vector<16x128xf32>
    %cst_155 = arith.constant 0.000000e+00 : f32
    %569 = vector.broadcast %cst_155 : f32 to vector<16x128xf32>
    %570 = arith.maximumf %568, %569 : vector<16x128xf32>
    %571 = arith.truncf %570 : vector<16x128xf32> to vector<16x128xbf16>
    %c0_156 = arith.constant 0 : index
    %c0_157 = arith.constant 0 : index
    %572 = vector.load %arg9[%c0_156, %c0_157] : memref<128x128xbf16, #tpu.memory_space<vmem>>, vector<128x128xbf16>
    %cst_158 = arith.constant dense<0.000000e+00> : vector<16x128xf32>
    %573 = tpu.matmul %571, %572, %cst_158 {dimension_numbers = #tpu.dot_dimension_numbers<[1], [0], [0], [1], [0, 0, 1, 1], [], []>} : vector<16x128xbf16>, vector<128x128xbf16>, vector<16x128xf32> -> vector<16x128xf32>
    %c0_159 = arith.constant 0 : index
    %c0_160 = arith.constant 0 : index
    %574 = vector.load %arg10[%c0_159, %c0_160] : memref<1x128xf32, #tpu.memory_space<vmem>>, vector<1x128xf32>
    %575 = vector.broadcast %574 : vector<1x128xf32> to vector<16x128xf32>
    %576 = arith.addf %573, %575 : vector<16x128xf32>
    %c0_161 = arith.constant 0 : index
    %c0_162 = arith.constant 0 : index
    %577 = vector.load %arg11[%c0_161, %c0_162] : memref<16x128xf32, #tpu.memory_space<vmem>>, vector<16x128xf32>
    tpu.vector_store %arg11[%c0_161, %c0_162], %576 {strides = array<i32>} : memref<16x128xf32, #tpu.memory_space<vmem>>, vector<16x128xf32>,
    return
  }
}

</mosaic_0001>

<llo_original>
// kernel: lstm_model_forward.1
$region0: #{lstm_model_forward.1}
  #allocation0 [shape = 'u32[]', space=smem, size = 0x4, offset = 0x4, fixed_abs, tag = 'smem constant byte address 0x4 - core index']
  #allocation1 [shape = 'u32[144,128]{1,0:T(1,128)}', space=vmem, size = 0x12000, scoped, tag = 'internal scratch']
  #allocation2 [shape = 'f32[8,8,128]{2,1,0:T(8,128)}', space=vmem, size = 0x8000, scoped, tag = 'scratch operand']
  #allocation3 [shape = 'bf16[8,8,32]{2,1,0:T(8,128)(2,1)}', space=vmem, size = 0x4000, scoped, tag = 'scratch operand']
  %s0 = inlined_call_operand.vmem [shape: bf16[8,8,4], index: 0, kind: input, shape index: {}]
  %s1 = inlined_call_operand.vmem [shape: bf16[4,128], index: 1, kind: input, shape index: {}]
  %s2 = inlined_call_operand.vmem [shape: bf16[32,128], index: 2, kind: input, shape index: {}]
  %s3 = inlined_call_operand.vmem [shape: f32[1,128], index: 3, kind: input, shape index: {}]
  %s4 = inlined_call_operand.vmem [shape: bf16[32,128], index: 4, kind: input, shape index: {}]
  %s5 = inlined_call_operand.vmem [shape: bf16[32,128], index: 5, kind: input, shape index: {}]
  %s6 = inlined_call_operand.vmem [shape: f32[1,128], index: 6, kind: input, shape index: {}]
  %s7 = inlined_call_operand.vmem [shape: bf16[32,128], index: 7, kind: input, shape index: {}]
  %s8 = inlined_call_operand.vmem [shape: f32[1,128], index: 8, kind: input, shape index: {}]
  %s9 = inlined_call_operand.vmem [shape: bf16[128,128], index: 9, kind: input, shape index: {}]
  %s10 = inlined_call_operand.vmem [shape: f32[1,128], index: 10, kind: input, shape index: {}]
  %s11 = inlined_call_operand.vmem [shape: f32[16,128], index: 11, kind: output, shape index: {}]
  %s12 = sld [smem:[#allocation0]]
  $region54: #{lstm_model_forward.1} parent=0
    _
  %s14 = ssub.s32 1, %s12
  %s15 = scalar_select 0, %s14, %s12
  // Predicated region
  $region2: #{lstm_model_forward.1} parent=0 // pred_check
    _
  $region3: #{lstm_model_forward.1} parent=0 // pred_check_branch
    %17 = sbr.rel (0) target = $region5
  $region4: #{lstm_model_forward.1} parent=0 // pred_region
    _
  $region5: #{lstm_model_forward.1} parent=0 // pred_fallthru
    _
  // Predicated region
  $region6: #{lstm_model_forward.1} parent=0 // pred_check
    _
  $region7: #{lstm_model_forward.1} parent=0 // pred_check_branch
    %19 = sbr.rel (0) target = $region9
  $region8: #{lstm_model_forward.1} parent=0 // pred_region
    _
  $region9: #{lstm_model_forward.1} parent=0 // pred_fallthru
    _
  // Predicated region
  $region10: #{lstm_model_forward.1} parent=0 // pred_check
    _
  $region11: #{lstm_model_forward.1} parent=0 // pred_check_branch
    %21 = sbr.rel (0) target = $region13
  $region12: #{lstm_model_forward.1} parent=0 // pred_region
    _
  $region13: #{lstm_model_forward.1} parent=0 // pred_fallthru
    _
  // Predicated region
  $region14: #{lstm_model_forward.1} parent=0 // pred_check
    _
  $region15: #{lstm_model_forward.1} parent=0 // pred_check_branch
    %23 = sbr.rel (0) target = $region17
  $region16: #{lstm_model_forward.1} parent=0 // pred_region
    _
  $region17: #{lstm_model_forward.1} parent=0 // pred_fallthru
    _
  // Predicated region
  $region18: #{lstm_model_forward.1} parent=0 // pred_check
    _
  $region19: #{lstm_model_forward.1} parent=0 // pred_check_branch
    %25 = sbr.rel (0) target = $region21
  $region20: #{lstm_model_forward.1} parent=0 // pred_region
    _
  $region21: #{lstm_model_forward.1} parent=0 // pred_fallthru
    _
  // Predicated region
  $region22: #{lstm_model_forward.1} parent=0 // pred_check
    _
  $region23: #{lstm_model_forward.1} parent=0 // pred_check_branch
    %27 = sbr.rel (0) target = $region25
  $region24: #{lstm_model_forward.1} parent=0 // pred_region
    _
  $region25: #{lstm_model_forward.1} parent=0 // pred_fallthru
    _
  // Predicated region
  $region26: #{lstm_model_forward.1} parent=0 // pred_check
    _
  $region27: #{lstm_model_forward.1} parent=0 // pred_check_branch
    %29 = sbr.rel (0) target = $region29
  $region28: #{lstm_model_forward.1} parent=0 // pred_region
    _
  $region29: #{lstm_model_forward.1} parent=0 // pred_fallthru
    _
  // Predicated region
  $region30: #{lstm_model_forward.1} parent=0 // pred_check
    _
  $region31: #{lstm_model_forward.1} parent=0 // pred_check_branch
    %31 = sbr.rel (0) target = $region33
  $region32: #{lstm_model_forward.1} parent=0 // pred_region
    _
  $region33: #{lstm_model_forward.1} parent=0 // pred_fallthru
    _
  // Predicated region
  $region34: #{lstm_model_forward.1} parent=0 // pred_check
    _
  $region35: #{lstm_model_forward.1} parent=0 // pred_check_branch
    %33 = sbr.rel (0) target = $region37
  $region36: #{lstm_model_forward.1} parent=0 // pred_region
    _
  $region37: #{lstm_model_forward.1} parent=0 // pred_fallthru
    _
  // Predicated region
  $region38: #{lstm_model_forward.1} parent=0 // pred_check
    _
  $region39: #{lstm_model_forward.1} parent=0 // pred_check_branch
    %35 = sbr.rel (0) target = $region41
  $region40: #{lstm_model_forward.1} parent=0 // pred_region
    _
  $region41: #{lstm_model_forward.1} parent=0 // pred_fallthru
    _
  // Predicated region
  $region42: #{lstm_model_forward.1} parent=0 // pred_check
    _
  $region43: #{lstm_model_forward.1} parent=0 // pred_check_branch
    %37 = sbr.rel (0) target = $region45
  $region44: #{lstm_model_forward.1} parent=0 // pred_region
    _
  $region45: #{lstm_model_forward.1} parent=0 // pred_fallthru
    _
  %v39 = vld [vmem:[%s0] sm:$0xf]
  %v40 = vld [vmem:[%s0 + $0x4] sm:$0xf]
  %v41 = vld [vmem:[%s0 + $0x8] sm:$0xf]
  %v42 = vld [vmem:[%s0 + $0xc] sm:$0xf]
  %v43 = vld [vmem:[%s0 + $0x10] sm:$0xf]
  %v44 = vld [vmem:[%s0 + $0x14] sm:$0xf]
  %v45 = vld [vmem:[%s0 + $0x18] sm:$0xf]
  %v46 = vld [vmem:[%s0 + $0x1c] sm:$0xf]
  %v47 = vld [vmem:[%s1] sm:$0x3]
  %v48 = vld [vmem:[%s3] sm:$0x1]
  %v50 = vlaneseq
  %v51 = vshrl.u32 %v50, 7
  %v52 = vsub.s32 0, %v51
  %v53 = vrot.slane %v48, %v52
  %v63 = vunpack.c.l.b16 %v39
  %v64 = vunpack.c.l.b16 %v40
  %v65 = vunpack.c.l.b16 %v41
  %v66 = vunpack.c.l.b16 %v42
  %v67 = vunpack.c.l.b16 %v43
  %v68 = vunpack.c.l.b16 %v44
  %v69 = vunpack.c.l.b16 %v45
  %v70 = vunpack.c.l.b16 %v46
  %v71 = vpack.c.b16 %v64, %v63
  %v72 = vpack.c.b16 %v66, %v65
  %v73 = vpack.c.b16 %v68, %v67
  %v74 = vpack.c.b16 %v70, %v69
  %vm75 = vcmask 31744
  %v77 = vsel %vm75, %v71, 0
  %v80 = vsel %vm75, %v72, 0
  %v83 = vsel %vm75, %v73, 0
  %v86 = vsel %vm75, %v74, 0
  %vm88 = vcmask 1041408
  %v90 = vsel %vm88, %v47, 0
  %92 = vmatprep.subr.bf16.mxu0 0
  %93 = vmatpush1.bf16.msra.mxu0 %v90
  %94 = vmatprep.subr.bf16.mxu0 0
  %95 = vmatpush1.bf16.msra.mxu0 0
  %96 = vmatprep.subr.bf16.mxu0 0
  %97 = vmatpush1.bf16.msra.mxu0 0
  %98 = vmatprep.subr.bf16.mxu0 0
  %99 = vmatpush1.bf16.msra.mxu0 0
  %100 = vmatprep.subr.bf16.mxu0 0
  %101 = vmatpush1.bf16.msra.mxu0 0
  %102 = vmatprep.subr.bf16.mxu0 0
  %103 = vmatpush1.bf16.msra.mxu0 0
  %104 = vmatprep.subr.bf16.mxu0 0
  %105 = vmatpush1.bf16.msra.mxu0 0
  %106 = vmatprep.subr.bf16.mxu0 0
  %107 = vmatpush1.bf16.msra.mxu0 0
  %108 = vmatprep.subr.bf16.mxu0 0
  %109 = vmatpush1.bf16.msra.mxu0 0
  %110 = vmatprep.subr.bf16.mxu0 0
  %111 = vmatpush1.bf16.msra.mxu0 0
  %112 = vmatprep.subr.bf16.mxu0 0
  %113 = vmatpush1.bf16.msra.mxu0 0
  %114 = vmatprep.subr.bf16.mxu0 0
  %115 = vmatpush1.bf16.msra.mxu0 0
  %116 = vmatprep.subr.bf16.mxu0 0
  %117 = vmatpush1.bf16.msra.mxu0 0
  %118 = vmatprep.subr.bf16.mxu0 0
  %119 = vmatpush1.bf16.msra.mxu0 0
  %120 = vmatprep.subr.bf16.mxu0 0
  %121 = vmatpush1.bf16.msra.mxu0 0
  %122 = vmatprep.subr.bf16.mxu0 0
  %123 = vmatpush1.bf16.msra.mxu0 0
  %124 = vmatprep.mubr.bf16.mxu0 0
  %125 = vmatmul.mubr.bf16.gmra.mrb[0].mxu0 %v77
  %v126 = vpop.f32.mrb[0].mxu0
  %v127 = vadd.f32 %v53, %v126
  %v128 = vpop.f32.mrb[0].mxu0
  %v129 = vpop.f32.mrb[0].mxu0
  %v130 = vadd.f32 %v53, %v129
  %v131 = vpop.f32.mrb[0].mxu0
  %132 = vmatprep.mubr.bf16.mxu0 0
  %133 = vmatmul.mubr.bf16.gmra.mrb[0].mxu0 %v80
  %v134 = vpop.f32.mrb[0].mxu0
  %v135 = vadd.f32 %v53, %v134
  %v136 = vpop.f32.mrb[0].mxu0
  %v137 = vpop.f32.mrb[0].mxu0
  %v138 = vadd.f32 %v53, %v137
  %v139 = vpop.f32.mrb[0].mxu0
  %140 = vmatprep.mubr.bf16.mxu0 0
  %141 = vmatmul.mubr.bf16.gmra.mrb[0].mxu0 %v83
  %v142 = vpop.f32.mrb[0].mxu0
  %v143 = vadd.f32 %v53, %v142
  %v144 = vpop.f32.mrb[0].mxu0
  %v145 = vpop.f32.mrb[0].mxu0
  %v146 = vadd.f32 %v53, %v145
  %v147 = vpop.f32.mrb[0].mxu0
  %148 = vmatprep.mubr.bf16.mxu0 0
  %149 = vmatmul.mubr.bf16.gmra.mrb[0].mxu0 %v86
  %v150 = vpop.f32.mrb[0].mxu0
  %v151 = vadd.f32 %v53, %v150
  %v152 = vpop.f32.mrb[0].mxu0
  %v153 = vpop.f32.mrb[0].mxu0
  %v154 = vadd.f32 %v53, %v153
  %v155 = vpop.f32.mrb[0].mxu0
  %156 = vdwg.mxu0
  %157 = vst [vmem:[#allocation2] sm:$0xff] %v127
  %158 = vst [vmem:[#allocation2 + $0x8] sm:$0xff] %v130
  %159 = vst [vmem:[#allocation2 + $0x10] sm:$0xff] %v135
  %160 = vst [vmem:[#allocation2 + $0x18] sm:$0xff] %v138
  %161 = vst [vmem:[#allocation2 + $0x20] sm:$0xff] %v143
  %162 = vst [vmem:[#allocation2 + $0x28] sm:$0xff] %v146
  %163 = vst [vmem:[#allocation2 + $0x30] sm:$0xff] %v151
  %164 = vst [vmem:[#allocation2 + $0x38] sm:$0xff] %v154
  %v165 = vld [vmem:[%s2] sm:$0xf]
  %v166 = vld [vmem:[%s2 + $0x4] sm:$0xf]
  %v167 = vld [vmem:[%s2 + $0x8] sm:$0xf]
  %v168 = vld [vmem:[%s2 + $0xc] sm:$0xf]
  %v169 = vld [vmem:[#allocation2] sm:$0xff]
  %v174 = vunpack.c.l.b16 %v165
  %v175 = vunpack.c.l.b16 %v166
  %v176 = vunpack.c.l.b16 %v167
  %v177 = vunpack.c.l.b16 %v168
  %v178 = vpack.c.b16 %v175, %v174
  %v179 = vpack.c.b16 %v177, %v176
  %vm182 = vcmask 261120
  %v184 = vsel %vm182, 0, 0
  %186 = vmatprep.subr.bf16.mxu0 0
  %187 = vmatpush1.bf16.msra.mxu0 %v178
  %188 = vmatprep.subr.bf16.mxu0 0
  %189 = vmatpush1.bf16.msra.mxu0 %v179
  %190 = vmatprep.subr.bf16.mxu0 0
  %191 = vmatpush1.bf16.msra.mxu0 0
  %192 = vmatprep.subr.bf16.mxu0 0
  %193 = vmatpush1.bf16.msra.mxu0 0
  %194 = vmatprep.subr.bf16.mxu0 0
  %195 = vmatpush1.bf16.msra.mxu0 0
  %196 = vmatprep.subr.bf16.mxu0 0
  %197 = vmatpush1.bf16.msra.mxu0 0
  %198 = vmatprep.subr.bf16.mxu0 0
  %199 = vmatpush1.bf16.msra.mxu0 0
  %200 = vmatprep.subr.bf16.mxu0 0
  %201 = vmatpush1.bf16.msra.mxu0 0
  %202 = vmatprep.subr.bf16.mxu0 0
  %203 = vmatpush1.bf16.msra.mxu0 0
  %204 = vmatprep.subr.bf16.mxu0 0
  %205 = vmatpush1.bf16.msra.mxu0 0
  %206 = vmatprep.subr.bf16.mxu0 0
  %207 = vmatpush1.bf16.msra.mxu0 0
  %208 = vmatprep.subr.bf16.mxu0 0
  %209 = vmatpush1.bf16.msra.mxu0 0
  %210 = vmatprep.subr.bf16.mxu0 0
  %211 = vmatpush1.bf16.msra.mxu0 0
  %212 = vmatprep.subr.bf16.mxu0 0
  %213 = vmatpush1.bf16.msra.mxu0 0
  %214 = vmatprep.subr.bf16.mxu0 0
  %215 = vmatpush1.bf16.msra.mxu0 0
  %216 = vmatprep.subr.bf16.mxu0 0
  %217 = vmatpush1.bf16.msra.mxu0 0
  %218 = vmatprep.mubr.bf16.mxu0 0
  %219 = vmatmul.mubr.bf16.gmra.mrb[0].mxu0 %v184
  %v220 = vpop.f32.mrb[0].mxu0
  %v221 = vadd.f32 0.0, %v220
  %v222 = vpop.f32.mrb[0].mxu0
  %v223 = vpop.f32.mrb[0].mxu0
  %v224 = vpop.f32.mrb[0].mxu0
  %225 = vdwg.mxu0
  %v226 = vadd.f32 %v169, %v221
  %v227 = vxor.u32 %v226, 2147483648
  %v228 = vmul.f32 %v227, 1.442695
  %v229 = vpow.pop %v228
  %v230 = vadd.f32 %v229, 1.0
  %v231 = vrcp.pop %v230
  %v232 = vmul.f32 1.0, %v231
  %v233 = vtanh.pop %v226
  %v234 = vmul.f32 %v232, 0.0
  %236 = vrot.lane.b32.xlu0 %v233, 64
  %v237 = vpop.permute.xlu0 %236
  %v239 = vmul.f32 %v232, %v237
  %241 = vrot.lane.b32.xlu0 %v239, 32
  %v242 = vpop.permute.xlu0 %241
  %v244 = vadd.f32 %v234, %v242
  %v245 = vtanh.pop %v244
  %247 = vrot.lane.b32.xlu0 %v245, 64
  %v248 = vpop.permute.xlu0 %247
  %v250 = vmul.f32 %v232, %v248
  %v251 = vpack.c.bf16 %v250, %v250
  %v253 = vunpack.c.l.b16 %v251
  %v254 = vpack.c.b16 %v253, %v253
  %255 = vrot.lane.b32.xlu0 %v254, 32
  %v256 = vpop.permute.xlu0 %255
  %vm258 = vcmask 257024
  %259 = vst.msk [vmem:[#allocation3] sm:$0xf] %vm258, %v256
  %s260 = scalar_lea.vmem [#allocation2], 8
  %v261 = vld [vmem:[%s260] sm:$0xff]
  %262 = vrot.lane.b32.xlu0 %v251, 32
  %v263 = vpop.permute.xlu0 %262
  %v265 = vsel %vm182, %v263, 0
  %267 = vmatprep.subr.bf16.mxu0 0
  %268 = vmatpush1.bf16.msra.mxu0 %v178
  %269 = vmatprep.subr.bf16.mxu0 0
  %270 = vmatpush1.bf16.msra.mxu0 %v179
  %271 = vmatprep.subr.bf16.mxu0 0
  %272 = vmatpush1.bf16.msra.mxu0 0
  %273 = vmatprep.subr.bf16.mxu0 0
  %274 = vmatpush1.bf16.msra.mxu0 0
  %275 = vmatprep.subr.bf16.mxu0 0
  %276 = vmatpush1.bf16.msra.mxu0 0
  %277 = vmatprep.subr.bf16.mxu0 0
  %278 = vmatpush1.bf16.msra.mxu0 0
  %279 = vmatprep.subr.bf16.mxu0 0
  %280 = vmatpush1.bf16.msra.mxu0 0
  %281 = vmatprep.subr.bf16.mxu0 0
  %282 = vmatpush1.bf16.msra.mxu0 0
  %283 = vmatprep.subr.bf16.mxu0 0
  %284 = vmatpush1.bf16.msra.mxu0 0
  %285 = vmatprep.subr.bf16.mxu0 0
  %286 = vmatpush1.bf16.msra.mxu0 0
  %287 = vmatprep.subr.bf16.mxu0 0
  %288 = vmatpush1.bf16.msra.mxu0 0
  %289 = vmatprep.subr.bf16.mxu0 0
  %290 = vmatpush1.bf16.msra.mxu0 0
  %291 = vmatprep.subr.bf16.mxu0 0
  %292 = vmatpush1.bf16.msra.mxu0 0
  %293 = vmatprep.subr.bf16.mxu0 0
  %294 = vmatpush1.bf16.msra.mxu0 0
  %295 = vmatprep.subr.bf16.mxu0 0
  %296 = vmatpush1.bf16.msra.mxu0 0
  %297 = vmatprep.subr.bf16.mxu0 0
  %298 = vmatpush1.bf16.msra.mxu0 0
  %299 = vmatprep.mubr.bf16.mxu0 0
  %300 = vmatmul.mubr.bf16.gmra.mrb[0].mxu0 %v265
  %v301 = vpop.f32.mrb[0].mxu0
  %v302 = vadd.f32 0.0, %v301
  %v303 = vpop.f32.mrb[0].mxu0
  %v304 = vpop.f32.mrb[0].mxu0
  %v305 = vpop.f32.mrb[0].mxu0
  %306 = vdwg.mxu0
  %v307 = vadd.f32 %v261, %v302
  %v308 = vxor.u32 %v307, 2147483648
  %v309 = vmul.f32 %v308, 1.442695
  %v310 = vpow.pop %v309
  %v311 = vadd.f32 %v310, 1.0
  %v312 = vrcp.pop %v311
  %v313 = vmul.f32 1.0, %v312
  %v314 = vtanh.pop %v307
  %v315 = vmul.f32 %v313, %v244
  %317 = vrot.lane.b32.xlu0 %v314, 64
  %v318 = vpop.permute.xlu0 %317
  %v320 = vmul.f32 %v313, %v318
  %322 = vrot.lane.b32.xlu0 %v320, 32
  %v323 = vpop.permute.xlu0 %322
  %v325 = vadd.f32 %v315, %v323
  %v326 = vtanh.pop %v325
  %328 = vrot.lane.b32.xlu0 %v326, 64
  %v329 = vpop.permute.xlu0 %328
  %v331 = vmul.f32 %v313, %v329
  %v332 = vpack.c.bf16 %v331, %v331
  %v334 = vunpack.c.l.b16 %v332
  %v335 = vpack.c.b16 %v334, %v334
  %336 = vrot.lane.b32.xlu0 %v335, 32
  %v337 = vpop.permute.xlu0 %336
  %s339 = scalar_lea.vmem [#allocation3], 4
  %340 = vst.msk [vmem:[%s339] sm:$0xf] %vm258, %v337
  %s341 = scalar_lea.vmem [#allocation2], 16
  %v342 = vld [vmem:[%s341] sm:$0xff]
  %343 = vrot.lane.b32.xlu0 %v332, 32
  %v344 = vpop.permute.xlu0 %343
  %v346 = vsel %vm182, %v344, 0
  %348 = vmatprep.subr.bf16.mxu0 0
  %349 = vmatpush1.bf16.msra.mxu0 %v178
  %350 = vmatprep.subr.bf16.mxu0 0
  %351 = vmatpush1.bf16.msra.mxu0 %v179
  %352 = vmatprep.subr.bf16.mxu0 0
  %353 = vmatpush1.bf16.msra.mxu0 0
  %354 = vmatprep.subr.bf16.mxu0 0
  %355 = vmatpush1.bf16.msra.mxu0 0
  %356 = vmatprep.subr.bf16.mxu0 0
  %357 = vmatpush1.bf16.msra.mxu0 0
  %358 = vmatprep.subr.bf16.mxu0 0
  %359 = vmatpush1.bf16.msra.mxu0 0
  %360 = vmatprep.subr.bf16.mxu0 0
  %361 = vmatpush1.bf16.msra.mxu0 0
  %362 = vmatprep.subr.bf16.mxu0 0
  %363 = vmatpush1.bf16.msra.mxu0 0
  %364 = vmatprep.subr.bf16.mxu0 0
  %365 = vmatpush1.bf16.msra.mxu0 0
  %366 = vmatprep.subr.bf16.mxu0 0
  %367 = vmatpush1.bf16.msra.mxu0 0
  %368 = vmatprep.subr.bf16.mxu0 0
  %369 = vmatpush1.bf16.msra.mxu0 0
  %370 = vmatprep.subr.bf16.mxu0 0
  %371 = vmatpush1.bf16.msra.mxu0 0
  %372 = vmatprep.subr.bf16.mxu0 0
  %373 = vmatpush1.bf16.msra.mxu0 0
  %374 = vmatprep.subr.bf16.mxu0 0
  %375 = vmatpush1.bf16.msra.mxu0 0
  %376 = vmatprep.subr.bf16.mxu0 0
  %377 = vmatpush1.bf16.msra.mxu0 0
  %378 = vmatprep.subr.bf16.mxu0 0
  %379 = vmatpush1.bf16.msra.mxu0 0
  %380 = vmatprep.mubr.bf16.mxu0 0
  %381 = vmatmul.mubr.bf16.gmra.mrb[0].mxu0 %v346
  %v382 = vpop.f32.mrb[0].mxu0
  %v383 = vadd.f32 0.0, %v382
  %v384 = vpop.f32.mrb[0].mxu0
  %v385 = vpop.f32.mrb[0].mxu0
  %v386 = vpop.f32.mrb[0].mxu0
  %387 = vdwg.mxu0
  %v388 = vadd.f32 %v342, %v383
  %v389 = vxor.u32 %v388, 2147483648
  %v390 = vmul.f32 %v389, 1.442695
  %v391 = vpow.pop %v390
  %v392 = vadd.f32 %v391, 1.0
  %v393 = vrcp.pop %v392
  %v394 = vmul.f32 1.0, %v393
  %v395 = vtanh.pop %v388
  %v396 = vmul.f32 %v394, %v325
  %398 = vrot.lane.b32.xlu0 %v395, 64
  %v399 = vpop.permute.xlu0 %398
  %v401 = vmul.f32 %v394, %v399
  %403 = vrot.lane.b32.xlu0 %v401, 32
  %v404 = vpop.permute.xlu0 %403
  %v406 = vadd.f32 %v396, %v404
  %v407 = vtanh.pop %v406
  %409 = vrot.lane.b32.xlu0 %v407, 64
  %v410 = vpop.permute.xlu0 %409
  %v412 = vmul.f32 %v394, %v410
  %v413 = vpack.c.bf16 %v412, %v412
  %v415 = vunpack.c.l.b16 %v413
  %v416 = vpack.c.b16 %v415, %v415
  %417 = vrot.lane.b32.xlu0 %v416, 32
  %v418 = vpop.permute.xlu0 %417
  %s420 = scalar_lea.vmem [#allocation3], 8
  %421 = vst.msk [vmem:[%s420] sm:$0xf] %vm258, %v418
  %s422 = scalar_lea.vmem [#allocation2], 24
  %v423 = vld [vmem:[%s422] sm:$0xff]
  %424 = vrot.lane.b32.xlu0 %v413, 32
  %v425 = vpop.permute.xlu0 %424
  %v427 = vsel %vm182, %v425, 0
  %429 = vmatprep.subr.bf16.mxu0 0
  %430 = vmatpush1.bf16.msra.mxu0 %v178
  %431 = vmatprep.subr.bf16.mxu0 0
  %432 = vmatpush1.bf16.msra.mxu0 %v179
  %433 = vmatprep.subr.bf16.mxu0 0
  %434 = vmatpush1.bf16.msra.mxu0 0
  %435 = vmatprep.subr.bf16.mxu0 0
  %436 = vmatpush1.bf16.msra.mxu0 0
  %437 = vmatprep.subr.bf16.mxu0 0
  %438 = vmatpush1.bf16.msra.mxu0 0
  %439 = vmatprep.subr.bf16.mxu0 0
  %440 = vmatpush1.bf16.msra.mxu0 0
  %441 = vmatprep.subr.bf16.mxu0 0
  %442 = vmatpush1.bf16.msra.mxu0 0
  %443 = vmatprep.subr.bf16.mxu0 0
  %444 = vmatpush1.bf16.msra.mxu0 0
  %445 = vmatprep.subr.bf16.mxu0 0
  %446 = vmatpush1.bf16.msra.mxu0 0
  %447 = vmatprep.subr.bf16.mxu0 0
  %448 = vmatpush1.bf16.msra.mxu0 0
  %449 = vmatprep.subr.bf16.mxu0 0
  %450 = vmatpush1.bf16.msra.mxu0 0
  %451 = vmatprep.subr.bf16.mxu0 0
  %452 = vmatpush1.bf16.msra.mxu0 0
  %453 = vmatprep.subr.bf16.mxu0 0
  %454 = vmatpush1.bf16.msra.mxu0 0
  %455 = vmatprep.subr.bf16.mxu0 0
  %456 = vmatpush1.bf16.msra.mxu0 0
  %457 = vmatprep.subr.bf16.mxu0 0
  %458 = vmatpush1.bf16.msra.mxu0 0
  %459 = vmatprep.subr.bf16.mxu0 0
  %460 = vmatpush1.bf16.msra.mxu0 0
  %461 = vmatprep.mubr.bf16.mxu0 0
  %462 = vmatmul.mubr.bf16.gmra.mrb[0].mxu0 %v427
  %v463 = vpop.f32.mrb[0].mxu0
  %v464 = vadd.f32 0.0, %v463
  %v465 = vpop.f32.mrb[0].mxu0
  %v466 = vpop.f32.mrb[0].mxu0
  %v467 = vpop.f32.mrb[0].mxu0
  %468 = vdwg.mxu0
  %v469 = vadd.f32 %v423, %v464
  %v470 = vxor.u32 %v469, 2147483648
  %v471 = vmul.f32 %v470, 1.442695
  %v472 = vpow.pop %v471
  %v473 = vadd.f32 %v472, 1.0
  %v474 = vrcp.pop %v473
  %v475 = vmul.f32 1.0, %v474
  %v476 = vtanh.pop %v469
  %v477 = vmul.f32 %v475, %v406
  %479 = vrot.lane.b32.xlu0 %v476, 64
  %v480 = vpop.permute.xlu0 %479
  %v482 = vmul.f32 %v475, %v480
  %484 = vrot.lane.b32.xlu0 %v482, 32
  %v485 = vpop.permute.xlu0 %484
  %v487 = vadd.f32 %v477, %v485
  %v488 = vtanh.pop %v487
  %490 = vrot.lane.b32.xlu0 %v488, 64
  %v491 = vpop.permute.xlu0 %490
  %v493 = vmul.f32 %v475, %v491
  %v494 = vpack.c.bf16 %v493, %v493
  %v496 = vunpack.c.l.b16 %v494
  %v497 = vpack.c.b16 %v496, %v496
  %498 = vrot.lane.b32.xlu0 %v497, 32
  %v499 = vpop.permute.xlu0 %498
  %s501 = scalar_lea.vmem [#allocation3], 12
  %502 = vst.msk [vmem:[%s501] sm:$0xf] %vm258, %v499
  %s503 = scalar_lea.vmem [#allocation2], 32
  %v504 = vld [vmem:[%s503] sm:$0xff]
  %505 = vrot.lane.b32.xlu0 %v494, 32
  %v506 = vpop.permute.xlu0 %505
  %v508 = vsel %vm182, %v506, 0
  %510 = vmatprep.subr.bf16.mxu0 0
  %511 = vmatpush1.bf16.msra.mxu0 %v178
  %512 = vmatprep.subr.bf16.mxu0 0
  %513 = vmatpush1.bf16.msra.mxu0 %v179
  %514 = vmatprep.subr.bf16.mxu0 0
  %515 = vmatpush1.bf16.msra.mxu0 0
  %516 = vmatprep.subr.bf16.mxu0 0
  %517 = vmatpush1.bf16.msra.mxu0 0
  %518 = vmatprep.subr.bf16.mxu0 0
  %519 = vmatpush1.bf16.msra.mxu0 0
  %520 = vmatprep.subr.bf16.mxu0 0
  %521 = vmatpush1.bf16.msra.mxu0 0
  %522 = vmatprep.subr.bf16.mxu0 0
  %523 = vmatpush1.bf16.msra.mxu0 0
  %524 = vmatprep.subr.bf16.mxu0 0
  %525 = vmatpush1.bf16.msra.mxu0 0
  %526 = vmatprep.subr.bf16.mxu0 0
  %527 = vmatpush1.bf16.msra.mxu0 0
  %528 = vmatprep.subr.bf16.mxu0 0
  %529 = vmatpush1.bf16.msra.mxu0 0
  %530 = vmatprep.subr.bf16.mxu0 0
  %531 = vmatpush1.bf16.msra.mxu0 0
  %532 = vmatprep.subr.bf16.mxu0 0
  %533 = vmatpush1.bf16.msra.mxu0 0
  %534 = vmatprep.subr.bf16.mxu0 0
  %535 = vmatpush1.bf16.msra.mxu0 0
  %536 = vmatprep.subr.bf16.mxu0 0
  %537 = vmatpush1.bf16.msra.mxu0 0
  %538 = vmatprep.subr.bf16.mxu0 0
  %539 = vmatpush1.bf16.msra.mxu0 0
  %540 = vmatprep.subr.bf16.mxu0 0
  %541 = vmatpush1.bf16.msra.mxu0 0
  %542 = vmatprep.mubr.bf16.mxu0 0
  %543 = vmatmul.mubr.bf16.gmra.mrb[0].mxu0 %v508
  %v544 = vpop.f32.mrb[0].mxu0
  %v545 = vadd.f32 0.0, %v544
  %v546 = vpop.f32.mrb[0].mxu0
  %v547 = vpop.f32.mrb[0].mxu0
  %v548 = vpop.f32.mrb[0].mxu0
  %549 = vdwg.mxu0
  %v550 = vadd.f32 %v504, %v545
  %v551 = vxor.u32 %v550, 2147483648
  %v552 = vmul.f32 %v551, 1.442695
  %v553 = vpow.pop %v552
  %v554 = vadd.f32 %v553, 1.0
  %v555 = vrcp.pop %v554
  %v556 = vmul.f32 1.0, %v555
  %v557 = vtanh.pop %v550
  %v558 = vmul.f32 %v556, %v487
  %560 = vrot.lane.b32.xlu0 %v557, 64
  %v561 = vpop.permute.xlu0 %560
  %v563 = vmul.f32 %v556, %v561
  %565 = vrot.lane.b32.xlu0 %v563, 32
  %v566 = vpop.permute.xlu0 %565
  %v568 = vadd.f32 %v558, %v566
  %v569 = vtanh.pop %v568
  %571 = vrot.lane.b32.xlu0 %v569, 64
  %v572 = vpop.permute.xlu0 %571
  %v574 = vmul.f32 %v556, %v572
  %v575 = vpack.c.bf16 %v574, %v574
  %v577 = vunpack.c.l.b16 %v575
  %v578 = vpack.c.b16 %v577, %v577
  %579 = vrot.lane.b32.xlu0 %v578, 32
  %v580 = vpop.permute.xlu0 %579
  %s582 = scalar_lea.vmem [#allocation3], 16
  %583 = vst.msk [vmem:[%s582] sm:$0xf] %vm258, %v580
  %s584 = scalar_lea.vmem [#allocation2], 40
  %v585 = vld [vmem:[%s584] sm:$0xff]
  %586 = vrot.lane.b32.xlu0 %v575, 32
  %v587 = vpop.permute.xlu0 %586
  %v589 = vsel %vm182, %v587, 0
  %591 = vmatprep.subr.bf16.mxu0 0
  %592 = vmatpush1.bf16.msra.mxu0 %v178
  %593 = vmatprep.subr.bf16.mxu0 0
  %594 = vmatpush1.bf16.msra.mxu0 %v179
  %595 = vmatprep.subr.bf16.mxu0 0
  %596 = vmatpush1.bf16.msra.mxu0 0
  %597 = vmatprep.subr.bf16.mxu0 0
  %598 = vmatpush1.bf16.msra.mxu0 0
  %599 = vmatprep.subr.bf16.mxu0 0
  %600 = vmatpush1.bf16.msra.mxu0 0
  %601 = vmatprep.subr.bf16.mxu0 0
  %602 = vmatpush1.bf16.msra.mxu0 0
  %603 = vmatprep.subr.bf16.mxu0 0
  %604 = vmatpush1.bf16.msra.mxu0 0
  %605 = vmatprep.subr.bf16.mxu0 0
  %606 = vmatpush1.bf16.msra.mxu0 0
  %607 = vmatprep.subr.bf16.mxu0 0
  %608 = vmatpush1.bf16.msra.mxu0 0
  %609 = vmatprep.subr.bf16.mxu0 0
  %610 = vmatpush1.bf16.msra.mxu0 0
  %611 = vmatprep.subr.bf16.mxu0 0
  %612 = vmatpush1.bf16.msra.mxu0 0
  %613 = vmatprep.subr.bf16.mxu0 0
  %614 = vmatpush1.bf16.msra.mxu0 0
  %615 = vmatprep.subr.bf16.mxu0 0
  %616 = vmatpush1.bf16.msra.mxu0 0
  %617 = vmatprep.subr.bf16.mxu0 0
  %618 = vmatpush1.bf16.msra.mxu0 0
  %619 = vmatprep.subr.bf16.mxu0 0
  %620 = vmatpush1.bf16.msra.mxu0 0
  %621 = vmatprep.subr.bf16.mxu0 0
  %622 = vmatpush1.bf16.msra.mxu0 0
  %623 = vmatprep.mubr.bf16.mxu0 0
  %624 = vmatmul.mubr.bf16.gmra.mrb[0].mxu0 %v589
  %v625 = vpop.f32.mrb[0].mxu0
  %v626 = vadd.f32 0.0, %v625
  %v627 = vpop.f32.mrb[0].mxu0
  %v628 = vpop.f32.mrb[0].mxu0
  %v629 = vpop.f32.mrb[0].mxu0
  %630 = vdwg.mxu0
  %v631 = vadd.f32 %v585, %v626
  %v632 = vxor.u32 %v631, 2147483648
  %v633 = vmul.f32 %v632, 1.442695
  %v634 = vpow.pop %v633
  %v635 = vadd.f32 %v634, 1.0
  %v636 = vrcp.pop %v635
  %v637 = vmul.f32 1.0, %v636
  %v638 = vtanh.pop %v631
  %v639 = vmul.f32 %v637, %v568
  %641 = vrot.lane.b32.xlu0 %v638, 64
  %v642 = vpop.permute.xlu0 %641
  %v644 = vmul.f32 %v637, %v642
  %646 = vrot.lane.b32.xlu0 %v644, 32
  %v647 = vpop.permute.xlu0 %646
  %v649 = vadd.f32 %v639, %v647
  %v650 = vtanh.pop %v649
  %652 = vrot.lane.b32.xlu0 %v650, 64
  %v653 = vpop.permute.xlu0 %652
  %v655 = vmul.f32 %v637, %v653
  %v656 = vpack.c.bf16 %v655, %v655
  %v658 = vunpack.c.l.b16 %v656
  %v659 = vpack.c.b16 %v658, %v658
  %660 = vrot.lane.b32.xlu0 %v659, 32
  %v661 = vpop.permute.xlu0 %660
  %s663 = scalar_lea.vmem [#allocation3], 20
  %664 = vst.msk [vmem:[%s663] sm:$0xf] %vm258, %v661
  %s665 = scalar_lea.vmem [#allocation2], 48
  %v666 = vld [vmem:[%s665] sm:$0xff]
  %667 = vrot.lane.b32.xlu0 %v656, 32
  %v668 = vpop.permute.xlu0 %667
  %v670 = vsel %vm182, %v668, 0
  %672 = vmatprep.subr.bf16.mxu0 0
  %673 = vmatpush1.bf16.msra.mxu0 %v178
  %674 = vmatprep.subr.bf16.mxu0 0
  %675 = vmatpush1.bf16.msra.mxu0 %v179
  %676 = vmatprep.subr.bf16.mxu0 0
  %677 = vmatpush1.bf16.msra.mxu0 0
  %678 = vmatprep.subr.bf16.mxu0 0
  %679 = vmatpush1.bf16.msra.mxu0 0
  %680 = vmatprep.subr.bf16.mxu0 0
  %681 = vmatpush1.bf16.msra.mxu0 0
  %682 = vmatprep.subr.bf16.mxu0 0
  %683 = vmatpush1.bf16.msra.mxu0 0
  %684 = vmatprep.subr.bf16.mxu0 0
  %685 = vmatpush1.bf16.msra.mxu0 0
  %686 = vmatprep.subr.bf16.mxu0 0
  %687 = vmatpush1.bf16.msra.mxu0 0
  %688 = vmatprep.subr.bf16.mxu0 0
  %689 = vmatpush1.bf16.msra.mxu0 0
  %690 = vmatprep.subr.bf16.mxu0 0
  %691 = vmatpush1.bf16.msra.mxu0 0
  %692 = vmatprep.subr.bf16.mxu0 0
  %693 = vmatpush1.bf16.msra.mxu0 0
  %694 = vmatprep.subr.bf16.mxu0 0
  %695 = vmatpush1.bf16.msra.mxu0 0
  %696 = vmatprep.subr.bf16.mxu0 0
  %697 = vmatpush1.bf16.msra.mxu0 0
  %698 = vmatprep.subr.bf16.mxu0 0
  %699 = vmatpush1.bf16.msra.mxu0 0
  %700 = vmatprep.subr.bf16.mxu0 0
  %701 = vmatpush1.bf16.msra.mxu0 0
  %702 = vmatprep.subr.bf16.mxu0 0
  %703 = vmatpush1.bf16.msra.mxu0 0
  %704 = vmatprep.mubr.bf16.mxu0 0
  %705 = vmatmul.mubr.bf16.gmra.mrb[0].mxu0 %v670
  %v706 = vpop.f32.mrb[0].mxu0
  %v707 = vadd.f32 0.0, %v706
  %v708 = vpop.f32.mrb[0].mxu0
  %v709 = vpop.f32.mrb[0].mxu0
  %v710 = vpop.f32.mrb[0].mxu0
  %711 = vdwg.mxu0
  %v712 = vadd.f32 %v666, %v707
  %v713 = vxor.u32 %v712, 2147483648
  %v714 = vmul.f32 %v713, 1.442695
  %v715 = vpow.pop %v714
  %v716 = vadd.f32 %v715, 1.0
  %v717 = vrcp.pop %v716
  %v718 = vmul.f32 1.0, %v717
  %v719 = vtanh.pop %v712
  %v720 = vmul.f32 %v718, %v649
  %722 = vrot.lane.b32.xlu0 %v719, 64
  %v723 = vpop.permute.xlu0 %722
  %v725 = vmul.f32 %v718, %v723
  %727 = vrot.lane.b32.xlu0 %v725, 32
  %v728 = vpop.permute.xlu0 %727
  %v730 = vadd.f32 %v720, %v728
  %v731 = vtanh.pop %v730
  %733 = vrot.lane.b32.xlu0 %v731, 64
  %v734 = vpop.permute.xlu0 %733
  %v736 = vmul.f32 %v718, %v734
  %v737 = vpack.c.bf16 %v736, %v736
  %v739 = vunpack.c.l.b16 %v737
  %v740 = vpack.c.b16 %v739, %v739
  %741 = vrot.lane.b32.xlu0 %v740, 32
  %v742 = vpop.permute.xlu0 %741
  %s744 = scalar_lea.vmem [#allocation3], 24
  %745 = vst.msk [vmem:[%s744] sm:$0xf] %vm258, %v742
  %s746 = scalar_lea.vmem [#allocation2], 56
  %v747 = vld [vmem:[%s746] sm:$0xff]
  %748 = vrot.lane.b32.xlu0 %v737, 32
  %v749 = vpop.permute.xlu0 %748
  %v751 = vsel %vm182, %v749, 0
  %753 = vmatprep.subr.bf16.mxu0 0
  %754 = vmatpush1.bf16.msra.mxu0 %v178
  %755 = vmatprep.subr.bf16.mxu0 0
  %756 = vmatpush1.bf16.msra.mxu0 %v179
  %757 = vmatprep.subr.bf16.mxu0 0
  %758 = vmatpush1.bf16.msra.mxu0 0
  %759 = vmatprep.subr.bf16.mxu0 0
  %760 = vmatpush1.bf16.msra.mxu0 0
  %761 = vmatprep.subr.bf16.mxu0 0
  %762 = vmatpush1.bf16.msra.mxu0 0
  %763 = vmatprep.subr.bf16.mxu0 0
  %764 = vmatpush1.bf16.msra.mxu0 0
  %765 = vmatprep.subr.bf16.mxu0 0
  %766 = vmatpush1.bf16.msra.mxu0 0
  %767 = vmatprep.subr.bf16.mxu0 0
  %768 = vmatpush1.bf16.msra.mxu0 0
  %769 = vmatprep.subr.bf16.mxu0 0
  %770 = vmatpush1.bf16.msra.mxu0 0
  %771 = vmatprep.subr.bf16.mxu0 0
  %772 = vmatpush1.bf16.msra.mxu0 0
  %773 = vmatprep.subr.bf16.mxu0 0
  %774 = vmatpush1.bf16.msra.mxu0 0
  %775 = vmatprep.subr.bf16.mxu0 0
  %776 = vmatpush1.bf16.msra.mxu0 0
  %777 = vmatprep.subr.bf16.mxu0 0
  %778 = vmatpush1.bf16.msra.mxu0 0
  %779 = vmatprep.subr.bf16.mxu0 0
  %780 = vmatpush1.bf16.msra.mxu0 0
  %781 = vmatprep.subr.bf16.mxu0 0
  %782 = vmatpush1.bf16.msra.mxu0 0
  %783 = vmatprep.subr.bf16.mxu0 0
  %784 = vmatpush1.bf16.msra.mxu0 0
  %785 = vmatprep.mubr.bf16.mxu0 0
  %786 = vmatmul.mubr.bf16.gmra.mrb[0].mxu0 %v751
  %v787 = vpop.f32.mrb[0].mxu0
  %v788 = vadd.f32 0.0, %v787
  %v789 = vpop.f32.mrb[0].mxu0
  %v790 = vpop.f32.mrb[0].mxu0
  %v791 = vpop.f32.mrb[0].mxu0
  %792 = vdwg.mxu0
  %v793 = vadd.f32 %v747, %v788
  %v794 = vxor.u32 %v793, 2147483648
  %v795 = vmul.f32 %v794, 1.442695
  %v796 = vpow.pop %v795
  %v797 = vadd.f32 %v796, 1.0
  %v798 = vrcp.pop %v797
  %v799 = vmul.f32 1.0, %v798
  %v800 = vtanh.pop %v793
  %v801 = vmul.f32 %v799, %v730
  %803 = vrot.lane.b32.xlu0 %v800, 64
  %v804 = vpop.permute.xlu0 %803
  %v806 = vmul.f32 %v799, %v804
  %808 = vrot.lane.b32.xlu0 %v806, 32
  %v809 = vpop.permute.xlu0 %808
  %v811 = vadd.f32 %v801, %v809
  %v812 = vtanh.pop %v811
  %814 = vrot.lane.b32.xlu0 %v812, 64
  %v815 = vpop.permute.xlu0 %814
  %v817 = vmul.f32 %v799, %v815
  %v818 = vpack.c.bf16 %v817, %v817
  %v820 = vunpack.c.l.b16 %v818
  %v821 = vpack.c.b16 %v820, %v820
  %822 = vrot.lane.b32.xlu0 %v821, 32
  %v823 = vpop.permute.xlu0 %822
  %s825 = scalar_lea.vmem [#allocation3], 28
  %826 = vst.msk [vmem:[%s825] sm:$0xf] %vm258, %v823
  %v827 = vld [vmem:[#allocation3] sm:$0xf]
  %v828 = vld [vmem:[#allocation3 + $0x4] sm:$0xf]
  %v829 = vld [vmem:[#allocation3 + $0x8] sm:$0xf]
  %v830 = vld [vmem:[#allocation3 + $0xc] sm:$0xf]
  %v831 = vld [vmem:[#allocation3 + $0x10] sm:$0xf]
  %v832 = vld [vmem:[#allocation3 + $0x14] sm:$0xf]
  %v833 = vld [vmem:[#allocation3 + $0x18] sm:$0xf]
  %v834 = vld [vmem:[#allocation3 + $0x1c] sm:$0xf]
  %v835 = vld [vmem:[%s4] sm:$0xf]
  %v836 = vld [vmem:[%s4 + $0x4] sm:$0xf]
  %v837 = vld [vmem:[%s4 + $0x8] sm:$0xf]
  %v838 = vld [vmem:[%s4 + $0xc] sm:$0xf]
  %v839 = vld [vmem:[%s6] sm:$0x1]
  %v841 = vlaneseq
  %v842 = vshrl.u32 %v841, 7
  %v843 = vsub.s32 0, %v842
  %v844 = vrot.slane %v839, %v843
  %v854 = vunpack.c.l.b16 %v827
  %v855 = vunpack.c.l.b16 %v828
  %v856 = vunpack.c.l.b16 %v829
  %v857 = vunpack.c.l.b16 %v830
  %v858 = vunpack.c.l.b16 %v831
  %v859 = vunpack.c.l.b16 %v832
  %v860 = vunpack.c.l.b16 %v833
  %v861 = vunpack.c.l.b16 %v834
  %v862 = vpack.c.b16 %v855, %v854
  %v863 = vpack.c.b16 %v857, %v856
  %v864 = vpack.c.b16 %v859, %v858
  %v865 = vpack.c.b16 %v861, %v860
  %v870 = vunpack.c.l.b16 %v835
  %v871 = vunpack.c.l.b16 %v836
  %v872 = vunpack.c.l.b16 %v837
  %v873 = vunpack.c.l.b16 %v838
  %v874 = vpack.c.b16 %v871, %v870
  %v875 = vpack.c.b16 %v873, %v872
  %v879 = vsel %vm182, %v862, 0
  %v882 = vsel %vm182, %v863, 0
  %v885 = vsel %vm182, %v864, 0
  %v888 = vsel %vm182, %v865, 0
  %890 = vmatprep.subr.bf16.mxu0 0
  %891 = vmatpush1.bf16.msra.mxu0 %v874
  %892 = vmatprep.subr.bf16.mxu0 0
  %893 = vmatpush1.bf16.msra.mxu0 %v875
  %894 = vmatprep.subr.bf16.mxu0 0
  %895 = vmatpush1.bf16.msra.mxu0 0
  %896 = vmatprep.subr.bf16.mxu0 0
  %897 = vmatpush1.bf16.msra.mxu0 0
  %898 = vmatprep.subr.bf16.mxu0 0
  %899 = vmatpush1.bf16.msra.mxu0 0
  %900 = vmatprep.subr.bf16.mxu0 0
  %901 = vmatpush1.bf16.msra.mxu0 0
  %902 = vmatprep.subr.bf16.mxu0 0
  %903 = vmatpush1.bf16.msra.mxu0 0
  %904 = vmatprep.subr.bf16.mxu0 0
  %905 = vmatpush1.bf16.msra.mxu0 0
  %906 = vmatprep.subr.bf16.mxu0 0
  %907 = vmatpush1.bf16.msra.mxu0 0
  %908 = vmatprep.subr.bf16.mxu0 0
  %909 = vmatpush1.bf16.msra.mxu0 0
  %910 = vmatprep.subr.bf16.mxu0 0
  %911 = vmatpush1.bf16.msra.mxu0 0
  %912 = vmatprep.subr.bf16.mxu0 0
  %913 = vmatpush1.bf16.msra.mxu0 0
  %914 = vmatprep.subr.bf16.mxu0 0
  %915 = vmatpush1.bf16.msra.mxu0 0
  %916 = vmatprep.subr.bf16.mxu0 0
  %917 = vmatpush1.bf16.msra.mxu0 0
  %918 = vmatprep.subr.bf16.mxu0 0
  %919 = vmatpush1.bf16.msra.mxu0 0
  %920 = vmatprep.subr.bf16.mxu0 0
  %921 = vmatpush1.bf16.msra.mxu0 0
  %922 = vmatprep.mubr.bf16.mxu0 0
  %923 = vmatmul.mubr.bf16.gmra.mrb[0].mxu0 %v879
  %v924 = vpop.f32.mrb[0].mxu0
  %v925 = vadd.f32 %v844, %v924
  %v926 = vpop.f32.mrb[0].mxu0
  %v927 = vpop.f32.mrb[0].mxu0
  %v928 = vadd.f32 %v844, %v927
  %v929 = vpop.f32.mrb[0].mxu0
  %930 = vmatprep.mubr.bf16.mxu0 0
  %931 = vmatmul.mubr.bf16.gmra.mrb[0].mxu0 %v882
  %v932 = vpop.f32.mrb[0].mxu0
  %v933 = vadd.f32 %v844, %v932
  %v934 = vpop.f32.mrb[0].mxu0
  %v935 = vpop.f32.mrb[0].mxu0
  %v936 = vadd.f32 %v844, %v935
  %v937 = vpop.f32.mrb[0].mxu0
  %938 = vmatprep.mubr.bf16.mxu0 0
  %939 = vmatmul.mubr.bf16.gmra.mrb[0].mxu0 %v885
  %v940 = vpop.f32.mrb[0].mxu0
  %v941 = vadd.f32 %v844, %v940
  %v942 = vpop.f32.mrb[0].mxu0
  %v943 = vpop.f32.mrb[0].mxu0
  %v944 = vadd.f32 %v844, %v943
  %v945 = vpop.f32.mrb[0].mxu0
  %946 = vmatprep.mubr.bf16.mxu0 0
  %947 = vmatmul.mubr.bf16.gmra.mrb[0].mxu0 %v888
  %v948 = vpop.f32.mrb[0].mxu0
  %v949 = vadd.f32 %v844, %v948
  %v950 = vpop.f32.mrb[0].mxu0
  %v951 = vpop.f32.mrb[0].mxu0
  %v952 = vadd.f32 %v844, %v951
  %v953 = vpop.f32.mrb[0].mxu0
  %954 = vdwg.mxu0
  %955 = vst [vmem:[#allocation2] sm:$0xff] %v925
  %956 = vst [vmem:[#allocation2 + $0x8] sm:$0xff] %v928
  %957 = vst [vmem:[#allocation2 + $0x10] sm:$0xff] %v933
  %958 = vst [vmem:[#allocation2 + $0x18] sm:$0xff] %v936
  %959 = vst [vmem:[#allocation2 + $0x20] sm:$0xff] %v941
  %960 = vst [vmem:[#allocation2 + $0x28] sm:$0xff] %v944
  %961 = vst [vmem:[#allocation2 + $0x30] sm:$0xff] %v949
  %962 = vst [vmem:[#allocation2 + $0x38] sm:$0xff] %v952
  %v963 = vld [vmem:[%s5] sm:$0xf]
  %v964 = vld [vmem:[%s5 + $0x4] sm:$0xf]
  %v965 = vld [vmem:[%s5 + $0x8] sm:$0xf]
  %v966 = vld [vmem:[%s5 + $0xc] sm:$0xf]
  %v967 = vld [vmem:[#allocation2] sm:$0xff]
  %v972 = vunpack.c.l.b16 %v963
  %v973 = vunpack.c.l.b16 %v964
  %v974 = vunpack.c.l.b16 %v965
  %v975 = vunpack.c.l.b16 %v966
  %v976 = vpack.c.b16 %v973, %v972
  %v977 = vpack.c.b16 %v975, %v974
  %980 = vmatprep.subr.bf16.mxu0 0
  %981 = vmatpush1.bf16.msra.mxu0 %v976
  %982 = vmatprep.subr.bf16.mxu0 0
  %983 = vmatpush1.bf16.msra.mxu0 %v977
  %984 = vmatprep.subr.bf16.mxu0 0
  %985 = vmatpush1.bf16.msra.mxu0 0
  %986 = vmatprep.subr.bf16.mxu0 0
  %987 = vmatpush1.bf16.msra.mxu0 0
  %988 = vmatprep.subr.bf16.mxu0 0
  %989 = vmatpush1.bf16.msra.mxu0 0
  %990 = vmatprep.subr.bf16.mxu0 0
  %991 = vmatpush1.bf16.msra.mxu0 0
  %992 = vmatprep.subr.bf16.mxu0 0
  %993 = vmatpush1.bf16.msra.mxu0 0
  %994 = vmatprep.subr.bf16.mxu0 0
  %995 = vmatpush1.bf16.msra.mxu0 0
  %996 = vmatprep.subr.bf16.mxu0 0
  %997 = vmatpush1.bf16.msra.mxu0 0
  %998 = vmatprep.subr.bf16.mxu0 0
  %999 = vmatpush1.bf16.msra.mxu0 0
  %1000 = vmatprep.subr.bf16.mxu0 0
  %1001 = vmatpush1.bf16.msra.mxu0 0
  %1002 = vmatprep.subr.bf16.mxu0 0
  %1003 = vmatpush1.bf16.msra.mxu0 0
  %1004 = vmatprep.subr.bf16.mxu0 0
  %1005 = vmatpush1.bf16.msra.mxu0 0
  %1006 = vmatprep.subr.bf16.mxu0 0
  %1007 = vmatpush1.bf16.msra.mxu0 0
  %1008 = vmatprep.subr.bf16.mxu0 0
  %1009 = vmatpush1.bf16.msra.mxu0 0
  %1010 = vmatprep.subr.bf16.mxu0 0
  %1011 = vmatpush1.bf16.msra.mxu0 0
  %1012 = vmatprep.mubr.bf16.mxu0 0
  %1013 = vmatmul.mubr.bf16.gmra.mrb[0].mxu0 %v184
  %v1014 = vpop.f32.mrb[0].mxu0
  %v1015 = vadd.f32 0.0, %v1014
  %v1016 = vpop.f32.mrb[0].mxu0
  %v1017 = vpop.f32.mrb[0].mxu0
  %v1018 = vpop.f32.mrb[0].mxu0
  %1019 = vdwg.mxu0
  %v1020 = vadd.f32 %v967, %v1015
  %v1021 = vxor.u32 %v1020, 2147483648
  %v1022 = vmul.f32 %v1021, 1.442695
  %v1023 = vpow.pop %v1022
  %v1024 = vadd.f32 %v1023, 1.0
  %v1025 = vrcp.pop %v1024
  %v1026 = vmul.f32 1.0, %v1025
  %v1027 = vtanh.pop %v1020
  %v1028 = vmul.f32 %v1026, 0.0
  %1030 = vrot.lane.b32.xlu0 %v1027, 64
  %v1031 = vpop.permute.xlu0 %1030
  %v1033 = vmul.f32 %v1026, %v1031
  %1035 = vrot.lane.b32.xlu0 %v1033, 32
  %v1036 = vpop.permute.xlu0 %1035
  %v1038 = vadd.f32 %v1028, %v1036
  %v1039 = vtanh.pop %v1038
  %1041 = vrot.lane.b32.xlu0 %v1039, 64
  %v1042 = vpop.permute.xlu0 %1041
  %v1044 = vmul.f32 %v1026, %v1042
  %v1045 = vld [vmem:[%s260] sm:$0xff]
  %v1046 = vpack.c.bf16 %v1044, %v1044
  %1048 = vrot.lane.b32.xlu0 %v1046, 32
  %v1049 = vpop.permute.xlu0 %1048
  %v1051 = vsel %vm182, %v1049, 0
  %1053 = vmatprep.subr.bf16.mxu0 0
  %1054 = vmatpush1.bf16.msra.mxu0 %v976
  %1055 = vmatprep.subr.bf16.mxu0 0
  %1056 = vmatpush1.bf16.msra.mxu0 %v977
  %1057 = vmatprep.subr.bf16.mxu0 0
  %1058 = vmatpush1.bf16.msra.mxu0 0
  %1059 = vmatprep.subr.bf16.mxu0 0
  %1060 = vmatpush1.bf16.msra.mxu0 0
  %1061 = vmatprep.subr.bf16.mxu0 0
  %1062 = vmatpush1.bf16.msra.mxu0 0
  %1063 = vmatprep.subr.bf16.mxu0 0
  %1064 = vmatpush1.bf16.msra.mxu0 0
  %1065 = vmatprep.subr.bf16.mxu0 0
  %1066 = vmatpush1.bf16.msra.mxu0 0
  %1067 = vmatprep.subr.bf16.mxu0 0
  %1068 = vmatpush1.bf16.msra.mxu0 0
  %1069 = vmatprep.subr.bf16.mxu0 0
  %1070 = vmatpush1.bf16.msra.mxu0 0
  %1071 = vmatprep.subr.bf16.mxu0 0
  %1072 = vmatpush1.bf16.msra.mxu0 0
  %1073 = vmatprep.subr.bf16.mxu0 0
  %1074 = vmatpush1.bf16.msra.mxu0 0
  %1075 = vmatprep.subr.bf16.mxu0 0
  %1076 = vmatpush1.bf16.msra.mxu0 0
  %1077 = vmatprep.subr.bf16.mxu0 0
  %1078 = vmatpush1.bf16.msra.mxu0 0
  %1079 = vmatprep.subr.bf16.mxu0 0
  %1080 = vmatpush1.bf16.msra.mxu0 0
  %1081 = vmatprep.subr.bf16.mxu0 0
  %1082 = vmatpush1.bf16.msra.mxu0 0
  %1083 = vmatprep.subr.bf16.mxu0 0
  %1084 = vmatpush1.bf16.msra.mxu0 0
  %1085 = vmatprep.mubr.bf16.mxu0 0
  %1086 = vmatmul.mubr.bf16.gmra.mrb[0].mxu0 %v1051
  %v1087 = vpop.f32.mrb[0].mxu0
  %v1088 = vadd.f32 0.0, %v1087
  %v1089 = vpop.f32.mrb[0].mxu0
  %v1090 = vpop.f32.mrb[0].mxu0
  %v1091 = vpop.f32.mrb[0].mxu0
  %1092 = vdwg.mxu0
  %v1093 = vadd.f32 %v1045, %v1088
  %v1094 = vxor.u32 %v1093, 2147483648
  %v1095 = vmul.f32 %v1094, 1.442695
  %v1096 = vpow.pop %v1095
  %v1097 = vadd.f32 %v1096, 1.0
  %v1098 = vrcp.pop %v1097
  %v1099 = vmul.f32 1.0, %v1098
  %v1100 = vtanh.pop %v1093
  %v1101 = vmul.f32 %v1099, %v1038
  %1103 = vrot.lane.b32.xlu0 %v1100, 64
  %v1104 = vpop.permute.xlu0 %1103
  %v1106 = vmul.f32 %v1099, %v1104
  %1108 = vrot.lane.b32.xlu0 %v1106, 32
  %v1109 = vpop.permute.xlu0 %1108
  %v1111 = vadd.f32 %v1101, %v1109
  %v1112 = vtanh.pop %v1111
  %1114 = vrot.lane.b32.xlu0 %v1112, 64
  %v1115 = vpop.permute.xlu0 %1114
  %v1117 = vmul.f32 %v1099, %v1115
  %v1118 = vld [vmem:[%s341] sm:$0xff]
  %v1119 = vpack.c.bf16 %v1117, %v1117
  %1121 = vrot.lane.b32.xlu0 %v1119, 32
  %v1122 = vpop.permute.xlu0 %1121
  %v1124 = vsel %vm182, %v1122, 0
  %1126 = vmatprep.subr.bf16.mxu0 0
  %1127 = vmatpush1.bf16.msra.mxu0 %v976
  %1128 = vmatprep.subr.bf16.mxu0 0
  %1129 = vmatpush1.bf16.msra.mxu0 %v977
  %1130 = vmatprep.subr.bf16.mxu0 0
  %1131 = vmatpush1.bf16.msra.mxu0 0
  %1132 = vmatprep.subr.bf16.mxu0 0
  %1133 = vmatpush1.bf16.msra.mxu0 0
  %1134 = vmatprep.subr.bf16.mxu0 0
  %1135 = vmatpush1.bf16.msra.mxu0 0
  %1136 = vmatprep.subr.bf16.mxu0 0
  %1137 = vmatpush1.bf16.msra.mxu0 0
  %1138 = vmatprep.subr.bf16.mxu0 0
  %1139 = vmatpush1.bf16.msra.mxu0 0
  %1140 = vmatprep.subr.bf16.mxu0 0
  %1141 = vmatpush1.bf16.msra.mxu0 0
  %1142 = vmatprep.subr.bf16.mxu0 0
  %1143 = vmatpush1.bf16.msra.mxu0 0
  %1144 = vmatprep.subr.bf16.mxu0 0
  %1145 = vmatpush1.bf16.msra.mxu0 0
  %1146 = vmatprep.subr.bf16.mxu0 0
  %1147 = vmatpush1.bf16.msra.mxu0 0
  %1148 = vmatprep.subr.bf16.mxu0 0
  %1149 = vmatpush1.bf16.msra.mxu0 0
  %1150 = vmatprep.subr.bf16.mxu0 0
  %1151 = vmatpush1.bf16.msra.mxu0 0
  %1152 = vmatprep.subr.bf16.mxu0 0
  %1153 = vmatpush1.bf16.msra.mxu0 0
  %1154 = vmatprep.subr.bf16.mxu0 0
  %1155 = vmatpush1.bf16.msra.mxu0 0
  %1156 = vmatprep.subr.bf16.mxu0 0
  %1157 = vmatpush1.bf16.msra.mxu0 0
  %1158 = vmatprep.mubr.bf16.mxu0 0
  %1159 = vmatmul.mubr.bf16.gmra.mrb[0].mxu0 %v1124
  %v1160 = vpop.f32.mrb[0].mxu0
  %v1161 = vadd.f32 0.0, %v1160
  %v1162 = vpop.f32.mrb[0].mxu0
  %v1163 = vpop.f32.mrb[0].mxu0
  %v1164 = vpop.f32.mrb[0].mxu0
  %1165 = vdwg.mxu0
  %v1166 = vadd.f32 %v1118, %v1161
  %v1167 = vxor.u32 %v1166, 2147483648
  %v1168 = vmul.f32 %v1167, 1.442695
  %v1169 = vpow.pop %v1168
  %v1170 = vadd.f32 %v1169, 1.0
  %v1171 = vrcp.pop %v1170
  %v1172 = vmul.f32 1.0, %v1171
  %v1173 = vtanh.pop %v1166
  %v1174 = vmul.f32 %v1172, %v1111
  %1176 = vrot.lane.b32.xlu0 %v1173, 64
  %v1177 = vpop.permute.xlu0 %1176
  %v1179 = vmul.f32 %v1172, %v1177
  %1181 = vrot.lane.b32.xlu0 %v1179, 32
  %v1182 = vpop.permute.xlu0 %1181
  %v1184 = vadd.f32 %v1174, %v1182
  %v1185 = vtanh.pop %v1184
  %1187 = vrot.lane.b32.xlu0 %v1185, 64
  %v1188 = vpop.permute.xlu0 %1187
  %v1190 = vmul.f32 %v1172, %v1188
  %v1191 = vld [vmem:[%s422] sm:$0xff]
  %v1192 = vpack.c.bf16 %v1190, %v1190
  %1194 = vrot.lane.b32.xlu0 %v1192, 32
  %v1195 = vpop.permute.xlu0 %1194
  %v1197 = vsel %vm182, %v1195, 0
  %1199 = vmatprep.subr.bf16.mxu0 0
  %1200 = vmatpush1.bf16.msra.mxu0 %v976
  %1201 = vmatprep.subr.bf16.mxu0 0
  %1202 = vmatpush1.bf16.msra.mxu0 %v977
  %1203 = vmatprep.subr.bf16.mxu0 0
  %1204 = vmatpush1.bf16.msra.mxu0 0
  %1205 = vmatprep.subr.bf16.mxu0 0
  %1206 = vmatpush1.bf16.msra.mxu0 0
  %1207 = vmatprep.subr.bf16.mxu0 0
  %1208 = vmatpush1.bf16.msra.mxu0 0
  %1209 = vmatprep.subr.bf16.mxu0 0
  %1210 = vmatpush1.bf16.msra.mxu0 0
  %1211 = vmatprep.subr.bf16.mxu0 0
  %1212 = vmatpush1.bf16.msra.mxu0 0
  %1213 = vmatprep.subr.bf16.mxu0 0
  %1214 = vmatpush1.bf16.msra.mxu0 0
  %1215 = vmatprep.subr.bf16.mxu0 0
  %1216 = vmatpush1.bf16.msra.mxu0 0
  %1217 = vmatprep.subr.bf16.mxu0 0
  %1218 = vmatpush1.bf16.msra.mxu0 0
  %1219 = vmatprep.subr.bf16.mxu0 0
  %1220 = vmatpush1.bf16.msra.mxu0 0
  %1221 = vmatprep.subr.bf16.mxu0 0
  %1222 = vmatpush1.bf16.msra.mxu0 0
  %1223 = vmatprep.subr.bf16.mxu0 0
  %1224 = vmatpush1.bf16.msra.mxu0 0
  %1225 = vmatprep.subr.bf16.mxu0 0
  %1226 = vmatpush1.bf16.msra.mxu0 0
  %1227 = vmatprep.subr.bf16.mxu0 0
  %1228 = vmatpush1.bf16.msra.mxu0 0
  %1229 = vmatprep.subr.bf16.mxu0 0
  %1230 = vmatpush1.bf16.msra.mxu0 0
  %1231 = vmatprep.mubr.bf16.mxu0 0
  %1232 = vmatmul.mubr.bf16.gmra.mrb[0].mxu0 %v1197
  %v1233 = vpop.f32.mrb[0].mxu0
  %v1234 = vadd.f32 0.0, %v1233
  %v1235 = vpop.f32.mrb[0].mxu0
  %v1236 = vpop.f32.mrb[0].mxu0
  %v1237 = vpop.f32.mrb[0].mxu0
  %1238 = vdwg.mxu0
  %v1239 = vadd.f32 %v1191, %v1234
  %v1240 = vxor.u32 %v1239, 2147483648
  %v1241 = vmul.f32 %v1240, 1.442695
  %v1242 = vpow.pop %v1241
  %v1243 = vadd.f32 %v1242, 1.0
  %v1244 = vrcp.pop %v1243
  %v1245 = vmul.f32 1.0, %v1244
  %v1246 = vtanh.pop %v1239
  %v1247 = vmul.f32 %v1245, %v1184
  %1249 = vrot.lane.b32.xlu0 %v1246, 64
  %v1250 = vpop.permute.xlu0 %1249
  %v1252 = vmul.f32 %v1245, %v1250
  %1254 = vrot.lane.b32.xlu0 %v1252, 32
  %v1255 = vpop.permute.xlu0 %1254
  %v1257 = vadd.f32 %v1247, %v1255
  %v1258 = vtanh.pop %v1257
  %1260 = vrot.lane.b32.xlu0 %v1258, 64
  %v1261 = vpop.permute.xlu0 %1260
  %v1263 = vmul.f32 %v1245, %v1261
  %v1264 = vld [vmem:[%s503] sm:$0xff]
  %v1265 = vpack.c.bf16 %v1263, %v1263
  %1267 = vrot.lane.b32.xlu0 %v1265, 32
  %v1268 = vpop.permute.xlu0 %1267
  %v1270 = vsel %vm182, %v1268, 0
  %1272 = vmatprep.subr.bf16.mxu0 0
  %1273 = vmatpush1.bf16.msra.mxu0 %v976
  %1274 = vmatprep.subr.bf16.mxu0 0
  %1275 = vmatpush1.bf16.msra.mxu0 %v977
  %1276 = vmatprep.subr.bf16.mxu0 0
  %1277 = vmatpush1.bf16.msra.mxu0 0
  %1278 = vmatprep.subr.bf16.mxu0 0
  %1279 = vmatpush1.bf16.msra.mxu0 0
  %1280 = vmatprep.subr.bf16.mxu0 0
  %1281 = vmatpush1.bf16.msra.mxu0 0
  %1282 = vmatprep.subr.bf16.mxu0 0
  %1283 = vmatpush1.bf16.msra.mxu0 0
  %1284 = vmatprep.subr.bf16.mxu0 0
  %1285 = vmatpush1.bf16.msra.mxu0 0
  %1286 = vmatprep.subr.bf16.mxu0 0
  %1287 = vmatpush1.bf16.msra.mxu0 0
  %1288 = vmatprep.subr.bf16.mxu0 0
  %1289 = vmatpush1.bf16.msra.mxu0 0
  %1290 = vmatprep.subr.bf16.mxu0 0
  %1291 = vmatpush1.bf16.msra.mxu0 0
  %1292 = vmatprep.subr.bf16.mxu0 0
  %1293 = vmatpush1.bf16.msra.mxu0 0
  %1294 = vmatprep.subr.bf16.mxu0 0
  %1295 = vmatpush1.bf16.msra.mxu0 0
  %1296 = vmatprep.subr.bf16.mxu0 0
  %1297 = vmatpush1.bf16.msra.mxu0 0
  %1298 = vmatprep.subr.bf16.mxu0 0
  %1299 = vmatpush1.bf16.msra.mxu0 0
  %1300 = vmatprep.subr.bf16.mxu0 0
  %1301 = vmatpush1.bf16.msra.mxu0 0
  %1302 = vmatprep.subr.bf16.mxu0 0
  %1303 = vmatpush1.bf16.msra.mxu0 0
  %1304 = vmatprep.mubr.bf16.mxu0 0
  %1305 = vmatmul.mubr.bf16.gmra.mrb[0].mxu0 %v1270
  %v1306 = vpop.f32.mrb[0].mxu0
  %v1307 = vadd.f32 0.0, %v1306
  %v1308 = vpop.f32.mrb[0].mxu0
  %v1309 = vpop.f32.mrb[0].mxu0
  %v1310 = vpop.f32.mrb[0].mxu0
  %1311 = vdwg.mxu0
  %v1312 = vadd.f32 %v1264, %v1307
  %v1313 = vxor.u32 %v1312, 2147483648
  %v1314 = vmul.f32 %v1313, 1.442695
  %v1315 = vpow.pop %v1314
  %v1316 = vadd.f32 %v1315, 1.0
  %v1317 = vrcp.pop %v1316
  %v1318 = vmul.f32 1.0, %v1317
  %v1319 = vtanh.pop %v1312
  %v1320 = vmul.f32 %v1318, %v1257
  %1322 = vrot.lane.b32.xlu0 %v1319, 64
  %v1323 = vpop.permute.xlu0 %1322
  %v1325 = vmul.f32 %v1318, %v1323
  %1327 = vrot.lane.b32.xlu0 %v1325, 32
  %v1328 = vpop.permute.xlu0 %1327
  %v1330 = vadd.f32 %v1320, %v1328
  %v1331 = vtanh.pop %v1330
  %1333 = vrot.lane.b32.xlu0 %v1331, 64
  %v1334 = vpop.permute.xlu0 %1333
  %v1336 = vmul.f32 %v1318, %v1334
  %v1337 = vld [vmem:[%s584] sm:$0xff]
  %v1338 = vpack.c.bf16 %v1336, %v1336
  %1340 = vrot.lane.b32.xlu0 %v1338, 32
  %v1341 = vpop.permute.xlu0 %1340
  %v1343 = vsel %vm182, %v1341, 0
  %1345 = vmatprep.subr.bf16.mxu0 0
  %1346 = vmatpush1.bf16.msra.mxu0 %v976
  %1347 = vmatprep.subr.bf16.mxu0 0
  %1348 = vmatpush1.bf16.msra.mxu0 %v977
  %1349 = vmatprep.subr.bf16.mxu0 0
  %1350 = vmatpush1.bf16.msra.mxu0 0
  %1351 = vmatprep.subr.bf16.mxu0 0
  %1352 = vmatpush1.bf16.msra.mxu0 0
  %1353 = vmatprep.subr.bf16.mxu0 0
  %1354 = vmatpush1.bf16.msra.mxu0 0
  %1355 = vmatprep.subr.bf16.mxu0 0
  %1356 = vmatpush1.bf16.msra.mxu0 0
  %1357 = vmatprep.subr.bf16.mxu0 0
  %1358 = vmatpush1.bf16.msra.mxu0 0
  %1359 = vmatprep.subr.bf16.mxu0 0
  %1360 = vmatpush1.bf16.msra.mxu0 0
  %1361 = vmatprep.subr.bf16.mxu0 0
  %1362 = vmatpush1.bf16.msra.mxu0 0
  %1363 = vmatprep.subr.bf16.mxu0 0
  %1364 = vmatpush1.bf16.msra.mxu0 0
  %1365 = vmatprep.subr.bf16.mxu0 0
  %1366 = vmatpush1.bf16.msra.mxu0 0
  %1367 = vmatprep.subr.bf16.mxu0 0
  %1368 = vmatpush1.bf16.msra.mxu0 0
  %1369 = vmatprep.subr.bf16.mxu0 0
  %1370 = vmatpush1.bf16.msra.mxu0 0
  %1371 = vmatprep.subr.bf16.mxu0 0
  %1372 = vmatpush1.bf16.msra.mxu0 0
  %1373 = vmatprep.subr.bf16.mxu0 0
  %1374 = vmatpush1.bf16.msra.mxu0 0
  %1375 = vmatprep.subr.bf16.mxu0 0
  %1376 = vmatpush1.bf16.msra.mxu0 0
  %1377 = vmatprep.mubr.bf16.mxu0 0
  %1378 = vmatmul.mubr.bf16.gmra.mrb[0].mxu0 %v1343
  %v1379 = vpop.f32.mrb[0].mxu0
  %v1380 = vadd.f32 0.0, %v1379
  %v1381 = vpop.f32.mrb[0].mxu0
  %v1382 = vpop.f32.mrb[0].mxu0
  %v1383 = vpop.f32.mrb[0].mxu0
  %1384 = vdwg.mxu0
  %v1385 = vadd.f32 %v1337, %v1380
  %v1386 = vxor.u32 %v1385, 2147483648
  %v1387 = vmul.f32 %v1386, 1.442695
  %v1388 = vpow.pop %v1387
  %v1389 = vadd.f32 %v1388, 1.0
  %v1390 = vrcp.pop %v1389
  %v1391 = vmul.f32 1.0, %v1390
  %v1392 = vtanh.pop %v1385
  %v1393 = vmul.f32 %v1391, %v1330
  %1395 = vrot.lane.b32.xlu0 %v1392, 64
  %v1396 = vpop.permute.xlu0 %1395
  %v1398 = vmul.f32 %v1391, %v1396
  %1400 = vrot.lane.b32.xlu0 %v1398, 32
  %v1401 = vpop.permute.xlu0 %1400
  %v1403 = vadd.f32 %v1393, %v1401
  %v1404 = vtanh.pop %v1403
  %1406 = vrot.lane.b32.xlu0 %v1404, 64
  %v1407 = vpop.permute.xlu0 %1406
  %v1409 = vmul.f32 %v1391, %v1407
  %v1410 = vld [vmem:[%s665] sm:$0xff]
  %v1411 = vpack.c.bf16 %v1409, %v1409
  %1413 = vrot.lane.b32.xlu0 %v1411, 32
  %v1414 = vpop.permute.xlu0 %1413
  %v1416 = vsel %vm182, %v1414, 0
  %1418 = vmatprep.subr.bf16.mxu0 0
  %1419 = vmatpush1.bf16.msra.mxu0 %v976
  %1420 = vmatprep.subr.bf16.mxu0 0
  %1421 = vmatpush1.bf16.msra.mxu0 %v977
  %1422 = vmatprep.subr.bf16.mxu0 0
  %1423 = vmatpush1.bf16.msra.mxu0 0
  %1424 = vmatprep.subr.bf16.mxu0 0
  %1425 = vmatpush1.bf16.msra.mxu0 0
  %1426 = vmatprep.subr.bf16.mxu0 0
  %1427 = vmatpush1.bf16.msra.mxu0 0
  %1428 = vmatprep.subr.bf16.mxu0 0
  %1429 = vmatpush1.bf16.msra.mxu0 0
  %1430 = vmatprep.subr.bf16.mxu0 0
  %1431 = vmatpush1.bf16.msra.mxu0 0
  %1432 = vmatprep.subr.bf16.mxu0 0
  %1433 = vmatpush1.bf16.msra.mxu0 0
  %1434 = vmatprep.subr.bf16.mxu0 0
  %1435 = vmatpush1.bf16.msra.mxu0 0
  %1436 = vmatprep.subr.bf16.mxu0 0
  %1437 = vmatpush1.bf16.msra.mxu0 0
  %1438 = vmatprep.subr.bf16.mxu0 0
  %1439 = vmatpush1.bf16.msra.mxu0 0
  %1440 = vmatprep.subr.bf16.mxu0 0
  %1441 = vmatpush1.bf16.msra.mxu0 0
  %1442 = vmatprep.subr.bf16.mxu0 0
  %1443 = vmatpush1.bf16.msra.mxu0 0
  %1444 = vmatprep.subr.bf16.mxu0 0
  %1445 = vmatpush1.bf16.msra.mxu0 0
  %1446 = vmatprep.subr.bf16.mxu0 0
  %1447 = vmatpush1.bf16.msra.mxu0 0
  %1448 = vmatprep.subr.bf16.mxu0 0
  %1449 = vmatpush1.bf16.msra.mxu0 0
  %1450 = vmatprep.mubr.bf16.mxu0 0
  %1451 = vmatmul.mubr.bf16.gmra.mrb[0].mxu0 %v1416
  %v1452 = vpop.f32.mrb[0].mxu0
  %v1453 = vadd.f32 0.0, %v1452
  %v1454 = vpop.f32.mrb[0].mxu0
  %v1455 = vpop.f32.mrb[0].mxu0
  %v1456 = vpop.f32.mrb[0].mxu0
  %1457 = vdwg.mxu0
  %v1458 = vadd.f32 %v1410, %v1453
  %v1459 = vxor.u32 %v1458, 2147483648
  %v1460 = vmul.f32 %v1459, 1.442695
  %v1461 = vpow.pop %v1460
  %v1462 = vadd.f32 %v1461, 1.0
  %v1463 = vrcp.pop %v1462
  %v1464 = vmul.f32 1.0, %v1463
  %v1465 = vtanh.pop %v1458
  %v1466 = vmul.f32 %v1464, %v1403
  %1468 = vrot.lane.b32.xlu0 %v1465, 64
  %v1469 = vpop.permute.xlu0 %1468
  %v1471 = vmul.f32 %v1464, %v1469
  %1473 = vrot.lane.b32.xlu0 %v1471, 32
  %v1474 = vpop.permute.xlu0 %1473
  %v1476 = vadd.f32 %v1466, %v1474
  %v1477 = vtanh.pop %v1476
  %1479 = vrot.lane.b32.xlu0 %v1477, 64
  %v1480 = vpop.permute.xlu0 %1479
  %v1482 = vmul.f32 %v1464, %v1480
  %v1483 = vld [vmem:[%s746] sm:$0xff]
  %v1484 = vpack.c.bf16 %v1482, %v1482
  %1486 = vrot.lane.b32.xlu0 %v1484, 32
  %v1487 = vpop.permute.xlu0 %1486
  %v1489 = vsel %vm182, %v1487, 0
  %1491 = vmatprep.subr.bf16.mxu0 0
  %1492 = vmatpush1.bf16.msra.mxu0 %v976
  %1493 = vmatprep.subr.bf16.mxu0 0
  %1494 = vmatpush1.bf16.msra.mxu0 %v977
  %1495 = vmatprep.subr.bf16.mxu0 0
  %1496 = vmatpush1.bf16.msra.mxu0 0
  %1497 = vmatprep.subr.bf16.mxu0 0
  %1498 = vmatpush1.bf16.msra.mxu0 0
  %1499 = vmatprep.subr.bf16.mxu0 0
  %1500 = vmatpush1.bf16.msra.mxu0 0
  %1501 = vmatprep.subr.bf16.mxu0 0
  %1502 = vmatpush1.bf16.msra.mxu0 0
  %1503 = vmatprep.subr.bf16.mxu0 0
  %1504 = vmatpush1.bf16.msra.mxu0 0
  %1505 = vmatprep.subr.bf16.mxu0 0
  %1506 = vmatpush1.bf16.msra.mxu0 0
  %1507 = vmatprep.subr.bf16.mxu0 0
  %1508 = vmatpush1.bf16.msra.mxu0 0
  %1509 = vmatprep.subr.bf16.mxu0 0
  %1510 = vmatpush1.bf16.msra.mxu0 0
  %1511 = vmatprep.subr.bf16.mxu0 0
  %1512 = vmatpush1.bf16.msra.mxu0 0
  %1513 = vmatprep.subr.bf16.mxu0 0
  %1514 = vmatpush1.bf16.msra.mxu0 0
  %1515 = vmatprep.subr.bf16.mxu0 0
  %1516 = vmatpush1.bf16.msra.mxu0 0
  %1517 = vmatprep.subr.bf16.mxu0 0
  %1518 = vmatpush1.bf16.msra.mxu0 0
  %1519 = vmatprep.subr.bf16.mxu0 0
  %1520 = vmatpush1.bf16.msra.mxu0 0
  %1521 = vmatprep.subr.bf16.mxu0 0
  %1522 = vmatpush1.bf16.msra.mxu0 0
  %1523 = vmatprep.mubr.bf16.mxu0 0
  %1524 = vmatmul.mubr.bf16.gmra.mrb[0].mxu0 %v1489
  %v1525 = vpop.f32.mrb[0].mxu0
  %v1526 = vadd.f32 0.0, %v1525
  %v1527 = vpop.f32.mrb[0].mxu0
  %v1528 = vpop.f32.mrb[0].mxu0
  %v1529 = vpop.f32.mrb[0].mxu0
  %1530 = vdwg.mxu0
  %v1531 = vadd.f32 %v1483, %v1526
  %v1532 = vxor.u32 %v1531, 2147483648
  %v1533 = vmul.f32 %v1532, 1.442695
  %v1534 = vpow.pop %v1533
  %v1535 = vadd.f32 %v1534, 1.0
  %v1536 = vrcp.pop %v1535
  %v1537 = vmul.f32 1.0, %v1536
  %v1538 = vtanh.pop %v1531
  %v1539 = vmul.f32 %v1537, %v1476
  %1541 = vrot.lane.b32.xlu0 %v1538, 64
  %v1542 = vpop.permute.xlu0 %1541
  %v1544 = vmul.f32 %v1537, %v1542
  %1546 = vrot.lane.b32.xlu0 %v1544, 32
  %v1547 = vpop.permute.xlu0 %1546
  %v1549 = vadd.f32 %v1539, %v1547
  %v1550 = vtanh.pop %v1549
  %1552 = vrot.lane.b32.xlu0 %v1550, 64
  %v1553 = vpop.permute.xlu0 %1552
  %v1555 = vmul.f32 %v1537, %v1553
  %v1556 = vmax.f32 %v817, 0.0
  %v1557 = vmax.f32 %v1555, 0.0
  %v1558 = vpack.c.bf16 %v1557, %v1556
  %v1559 = vld [vmem:[%s7] sm:$0xf]
  %v1560 = vld [vmem:[%s7 + $0x4] sm:$0xf]
  %v1561 = vld [vmem:[%s7 + $0x8] sm:$0xf]
  %v1562 = vld [vmem:[%s7 + $0xc] sm:$0xf]
  %v1563 = vld [vmem:[%s8] sm:$0x1]
  %v1565 = vlaneseq
  %v1566 = vshrl.u32 %v1565, 7
  %v1567 = vsub.s32 0, %v1566
  %v1568 = vrot.slane %v1563, %v1567
  %1571 = vrot.lane.b32.xlu0 %v1558, 32
  %v1572 = vpop.permute.xlu0 %1571
  %v1577 = vunpack.c.l.b16 %v1559
  %v1578 = vunpack.c.l.b16 %v1560
  %v1579 = vunpack.c.l.b16 %v1561
  %v1580 = vunpack.c.l.b16 %v1562
  %v1581 = vpack.c.b16 %v1578, %v1577
  %v1582 = vpack.c.b16 %v1580, %v1579
  %v1586 = vsel %vm182, %v1572, 0
  %1588 = vmatprep.subr.bf16.mxu0 0
  %1589 = vmatpush1.bf16.msra.mxu0 %v1581
  %1590 = vmatprep.subr.bf16.mxu0 0
  %1591 = vmatpush1.bf16.msra.mxu0 %v1582
  %1592 = vmatprep.subr.bf16.mxu0 0
  %1593 = vmatpush1.bf16.msra.mxu0 0
  %1594 = vmatprep.subr.bf16.mxu0 0
  %1595 = vmatpush1.bf16.msra.mxu0 0
  %1596 = vmatprep.subr.bf16.mxu0 0
  %1597 = vmatpush1.bf16.msra.mxu0 0
  %1598 = vmatprep.subr.bf16.mxu0 0
  %1599 = vmatpush1.bf16.msra.mxu0 0
  %1600 = vmatprep.subr.bf16.mxu0 0
  %1601 = vmatpush1.bf16.msra.mxu0 0
  %1602 = vmatprep.subr.bf16.mxu0 0
  %1603 = vmatpush1.bf16.msra.mxu0 0
  %1604 = vmatprep.subr.bf16.mxu0 0
  %1605 = vmatpush1.bf16.msra.mxu0 0
  %1606 = vmatprep.subr.bf16.mxu0 0
  %1607 = vmatpush1.bf16.msra.mxu0 0
  %1608 = vmatprep.subr.bf16.mxu0 0
  %1609 = vmatpush1.bf16.msra.mxu0 0
  %1610 = vmatprep.subr.bf16.mxu0 0
  %1611 = vmatpush1.bf16.msra.mxu0 0
  %1612 = vmatprep.subr.bf16.mxu0 0
  %1613 = vmatpush1.bf16.msra.mxu0 0
  %1614 = vmatprep.subr.bf16.mxu0 0
  %1615 = vmatpush1.bf16.msra.mxu0 0
  %1616 = vmatprep.subr.bf16.mxu0 0
  %1617 = vmatpush1.bf16.msra.mxu0 0
  %1618 = vmatprep.subr.bf16.mxu0 0
  %1619 = vmatpush1.bf16.msra.mxu0 0
  %1620 = vmatprep.mubr.bf16.mxu0 0
  %1621 = vmatmul.mubr.bf16.gmra.mrb[0].mxu0 %v1586
  %v1622 = vpop.f32.mrb[0].mxu0
  %v1623 = vadd.f32 %v1568, %v1622
  %v1624 = vpop.f32.mrb[0].mxu0
  %v1625 = vpop.f32.mrb[0].mxu0
  %v1626 = vadd.f32 %v1568, %v1625
  %v1627 = vpop.f32.mrb[0].mxu0
  %1628 = vdwg.mxu0
  %v1629 = vmax.f32 %v1623, 0.0
  %v1630 = vmax.f32 %v1626, 0.0
  %v1631 = vpack.c.bf16 %v1630, %v1629
  %v1632 = vld [vmem:[%s9] sm:$0xf]
  %v1633 = vld [vmem:[%s9 + $0x4] sm:$0xf]
  %v1634 = vld [vmem:[%s9 + $0x8] sm:$0xf]
  %v1635 = vld [vmem:[%s9 + $0xc] sm:$0xf]
  %v1636 = vld [vmem:[%s9 + $0x10] sm:$0xf]
  %v1637 = vld [vmem:[%s9 + $0x14] sm:$0xf]
  %v1638 = vld [vmem:[%s9 + $0x18] sm:$0xf]
  %v1639 = vld [vmem:[%s9 + $0x1c] sm:$0xf]
  %v1640 = vld [vmem:[%s9 + $0x20] sm:$0xf]
  %v1641 = vld [vmem:[%s9 + $0x24] sm:$0xf]
  %v1642 = vld [vmem:[%s9 + $0x28] sm:$0xf]
  %v1643 = vld [vmem:[%s9 + $0x2c] sm:$0xf]
  %v1644 = vld [vmem:[%s9 + $0x30] sm:$0xf]
  %v1645 = vld [vmem:[%s9 + $0x34] sm:$0xf]
  %v1646 = vld [vmem:[%s9 + $0x38] sm:$0xf]
  %v1647 = vld [vmem:[%s9 + $0x3c] sm:$0xf]
  %v1648 = vld [vmem:[%s10] sm:$0x1]
  %v1650 = vlaneseq
  %v1651 = vshrl.u32 %v1650, 7
  %v1652 = vsub.s32 0, %v1651
  %v1653 = vrot.slane %v1648, %v1652
  %v1671 = vunpack.c.l.b16 %v1632
  %v1672 = vunpack.c.l.b16 %v1633
  %v1673 = vunpack.c.l.b16 %v1634
  %v1674 = vunpack.c.l.b16 %v1635
  %v1675 = vunpack.c.l.b16 %v1636
  %v1676 = vunpack.c.l.b16 %v1637
  %v1677 = vunpack.c.l.b16 %v1638
  %v1678 = vunpack.c.l.b16 %v1639
  %v1679 = vunpack.c.l.b16 %v1640
  %v1680 = vunpack.c.l.b16 %v1641
  %v1681 = vunpack.c.l.b16 %v1642
  %v1682 = vunpack.c.l.b16 %v1643
  %v1683 = vunpack.c.l.b16 %v1644
  %v1684 = vunpack.c.l.b16 %v1645
  %v1685 = vunpack.c.l.b16 %v1646
  %v1686 = vunpack.c.l.b16 %v1647
  %v1687 = vpack.c.b16 %v1672, %v1671
  %v1688 = vpack.c.b16 %v1674, %v1673
  %v1689 = vpack.c.b16 %v1676, %v1675
  %v1690 = vpack.c.b16 %v1678, %v1677
  %v1691 = vpack.c.b16 %v1680, %v1679
  %v1692 = vpack.c.b16 %v1682, %v1681
  %v1693 = vpack.c.b16 %v1684, %v1683
  %v1694 = vpack.c.b16 %v1686, %v1685
  %1703 = vmatprep.subr.bf16.mxu0 0
  %1704 = vmatpush1.bf16.msra.mxu0 %v1687
  %1705 = vmatprep.subr.bf16.mxu0 0
  %1706 = vmatpush1.bf16.msra.mxu0 %v1688
  %1707 = vmatprep.subr.bf16.mxu0 0
  %1708 = vmatpush1.bf16.msra.mxu0 %v1689
  %1709 = vmatprep.subr.bf16.mxu0 0
  %1710 = vmatpush1.bf16.msra.mxu0 %v1690
  %1711 = vmatprep.subr.bf16.mxu0 0
  %1712 = vmatpush1.bf16.msra.mxu0 %v1691
  %1713 = vmatprep.subr.bf16.mxu0 0
  %1714 = vmatpush1.bf16.msra.mxu0 %v1692
  %1715 = vmatprep.subr.bf16.mxu0 0
  %1716 = vmatpush1.bf16.msra.mxu0 %v1693
  %1717 = vmatprep.subr.bf16.mxu0 0
  %1718 = vmatpush1.bf16.msra.mxu0 %v1694
  %1719 = vmatprep.subr.bf16.mxu0 0
  %1720 = vmatpush1.bf16.msra.mxu0 0
  %1721 = vmatprep.subr.bf16.mxu0 0
  %1722 = vmatpush1.bf16.msra.mxu0 0
  %1723 = vmatprep.subr.bf16.mxu0 0
  %1724 = vmatpush1.bf16.msra.mxu0 0
  %1725 = vmatprep.subr.bf16.mxu0 0
  %1726 = vmatpush1.bf16.msra.mxu0 0
  %1727 = vmatprep.subr.bf16.mxu0 0
  %1728 = vmatpush1.bf16.msra.mxu0 0
  %1729 = vmatprep.subr.bf16.mxu0 0
  %1730 = vmatpush1.bf16.msra.mxu0 0
  %1731 = vmatprep.subr.bf16.mxu0 0
  %1732 = vmatpush1.bf16.msra.mxu0 0
  %1733 = vmatprep.subr.bf16.mxu0 0
  %1734 = vmatpush1.bf16.msra.mxu0 0
  %1735 = vmatprep.mubr.bf16.mxu0 0
  %1736 = vmatmul.mubr.bf16.gmra.mrb[0].mxu0 %v1631
  %v1737 = vpop.f32.mrb[0].mxu0
  %v1738 = vadd.f32 %v1653, %v1737
  %v1739 = vpop.f32.mrb[0].mxu0
  %v1740 = vpop.f32.mrb[0].mxu0
  %v1741 = vadd.f32 %v1653, %v1740
  %v1742 = vpop.f32.mrb[0].mxu0
  %1743 = vdwg.mxu0
  %1744 = vst [vmem:[%s11] sm:$0xff] %v1738
  %1745 = vst [vmem:[%s11 + $0x8] sm:$0xff] %v1741
  // Predicated region
  $region46: #{lstm_model_forward.1} parent=0 // pred_check
    _
  $region47: #{lstm_model_forward.1} parent=0 // pred_check_branch
    %1747 = sbr.rel (0) target = $region49
  $region48: #{lstm_model_forward.1} parent=0 // pred_region
    _
  $region49: #{lstm_model_forward.1} parent=0 // pred_fallthru
    _
  // Predicated region
  $region50: #{lstm_model_forward.1} parent=0 // pred_check
    _
  $region51: #{lstm_model_forward.1} parent=0 // pred_check_branch
    %1749 = sbr.rel (0) target = $region53
  $region52: #{lstm_model_forward.1} parent=0 // pred_region
    _
  $region53: #{lstm_model_forward.1} parent=0 // pred_fallthru
    _

</llo_original>
